<compile_context>
chip_gen: v7x
topology: tpu7x:2x2x1
jax: 0.10.0
libtpu: 0.0.40
codegen_flags: <defaults>
</compile_context>

<pallas_src>
import functools

import jax
import jax.numpy as jnp
import numpy as np
from jax.experimental import pallas as pl
from jax.experimental.pallas import tpu as pltpu

EPS = 1e-5  # PyTorch BatchNorm1d default eps


# ---------------------------------------------------------------------------
# Fused Pallas kernel: all conv+ReLU+BN layers + flatten + Linear, one program
# ---------------------------------------------------------------------------
def _tcn_fused_kernel(x_ref, w_ref, aff_ref, pw_ref, pb_ref, o_ref,
                      buf_a, buf_b, flat_ref, *,
                      B, K, dils, pads, l_ins, l_outs, c_in, c_out, c_max):
    """Whole TCNBlock forward for the full batch, activations kept in VMEM.

    x_ref    : (B, S, c_in)          f32  input, channels-last
    w_ref    : (NL, K*c_max, c_out)  bf16 im2col conv weights (channel zero-padded)
    aff_ref  : (NL, 3, c_out)        f32  rows: [conv bias, bn scale, bn shift]
    pw_ref   : (l_final*c_out, OD)   bf16 projection weight, rows in t-major order
    pb_ref   : (1, OD)               f32  projection bias
    o_ref    : (B, OD)               f32  module output
    buf_a/b  : (B, l_pad_max, c_max) f32  ping-pong padded-activation scratch
    flat_ref : (B, l_final*c_out)    f32  lane-dense flatten scratch for the Linear
    """
    num_layers = len(dils)
    bufs = (buf_a, buf_b)
    f32 = jnp.float32

    # ---- layer-0 input prep: zero only pad slabs (+ stale channel tail), copy x ----
    pad0, l0 = pads[0], l_ins[0]
    buf_a[:, 0:pad0, :] = jnp.zeros((B, pad0, c_max), f32)
    buf_a[:, pad0 + l0:l0 + 2 * pad0, :] = jnp.zeros((B, pad0, c_max), f32)
    if c_in < c_max:  # keep the unused channel tail zero (zero-padded weights read it)
        buf_a[:, pad0:pad0 + l0, c_in:c_max] = jnp.zeros((B, l0, c_max - c_in), f32)
    buf_a[:, pad0:pad0 + l0, 0:c_in] = x_ref[...].astype(f32)

    for i in range(num_layers):                          # static unrolled layer loop
        cur, nxt = bufs[i % 2], bufs[(i + 1) % 2]
        dil, l_out = dils[i], l_outs[i]
        w_flat = w_ref[i]                                # (K*c_max, c_out) bf16
        bias = aff_ref[i, 0:1, :]                        # (1, c_out) f32
        scale = aff_ref[i, 1:2, :]
        shift = aff_ref[i, 2:3, :]

        last = (i + 1 == num_layers)
        if not last:
            # Zero only the pad slabs of the next buffer; its interior is overwritten.
            pad_n = pads[i + 1]
            nxt[:, 0:pad_n, :] = jnp.zeros((B, pad_n, c_max), f32)
            nxt[:, pad_n + l_out:l_out + 2 * pad_n, :] = jnp.zeros((B, pad_n, c_max), f32)

        for b in range(B):                               # static batch loop (no grid)
            # im2col: K shifted views concatenated along lanes -> ONE MXU matmul/layer.
            taps = [cur[b, k * dil:k * dil + l_out, :] for k in range(K)]
            x_col = jnp.concatenate(taps, axis=1).astype(jnp.bfloat16)  # (l_out, K*c_max)
            acc = jnp.dot(x_col, w_flat, preferred_element_type=f32)    # (l_out, c_out)

            # f32 epilogue: conv bias -> ReLU -> folded eval-mode BatchNorm; Dropout = id.
            y = jnp.maximum(acc + bias, 0.0) * scale + shift

            if not last:
                nxt[b, pads[i + 1]:pads[i + 1] + l_out, 0:c_out] = y
                if c_out < c_max:  # keep stale channel-tail columns zero for next reads
                    nxt[b, pads[i + 1]:pads[i + 1] + l_out, c_out:c_max] = (
                        jnp.zeros((l_out, c_max - c_out), f32))
            else:
                # Lane-dense flatten (t-major: flat idx = t*C + c) for the fused Linear.
                for t in range(l_out):
                    flat_ref[b:b + 1, t * c_out:(t + 1) * c_out] = y[t:t + 1, :]

    # ---- fused projection: (B, L*C) @ (L*C, out_dim) + bias, f32 accumulation ----
    flat = flat_ref[...].astype(jnp.bfloat16)
    out = jnp.dot(flat, pw_ref[...], preferred_element_type=jnp.float32) + pb_ref[...]
    o_ref[...] = out.astype(o_ref.dtype)


# ---------------------------------------------------------------------------
# One-time parameter packing (hoisted out of the forward path)
# ---------------------------------------------------------------------------
def prepare_params(params, *, kernel_size, num_layers, sequence_length):
    k = kernel_size
    c_in = params["layers"][0]["w"].shape[1]
    c_out = params["layers"][0]["w"].shape[2]
    c_max = max(c_in, c_out)

    # Static per-layer geometry (dilation, padding, lengths).
    dils, pads, l_ins, l_outs = [], [], [], []
    L = sequence_length
    for i in range(num_layers):
        dil = 2 ** i
        pad = (k - 1) * dil
        l_out = L + 2 * pad - dil * (k - 1)              # = L + pad (length grows)
        dils.append(dil); pads.append(pad); l_ins.append(L); l_outs.append(l_out)
        L = l_out
    l_final = L

    # im2col conv weights: zero-pad in_ch to c_max, fold the K taps into the contraction.
    w_stack, aff_stack = [], []
    for p in params["layers"]:
        w = p["w"]                                       # (K, in_ch, c_out)
        w = jnp.pad(w, ((0, 0), (0, c_max - w.shape[1]), (0, 0)))
        w_stack.append(w.reshape(k * c_max, c_out))      # row index = tap*c_max + ch
        scale = p["gamma"] / jnp.sqrt(p["var"] + EPS)
        shift = p["beta"] - p["mean"] * scale
        aff_stack.append(jnp.stack([p["b"], scale, shift], axis=0))
    w_all = jnp.stack(w_stack, axis=0).astype(jnp.bfloat16)     # (NL, K*c_max, c_out)
    aff_all = jnp.stack(aff_stack, axis=0).astype(jnp.float32)  # (NL, 3, c_out)

    # Projection weight rows permuted from PyTorch's flatten order (c*L + t) to the
    # kernel's t-major order (t*C + c); done once here, never in the forward path.
    pw = params["pw"]                                    # (c_out*l_final, out_dim)
    out_dim = pw.shape[1]
    pw_perm = (pw.reshape(c_out, l_final, out_dim)
                 .transpose(1, 0, 2)
                 .reshape(l_final * c_out, out_dim)).astype(jnp.bfloat16)
    pb = params["pb"].reshape(1, -1).astype(jnp.float32)

    geom = dict(dils=tuple(dils), pads=tuple(pads), l_ins=tuple(l_ins),
                l_outs=tuple(l_outs), c_in=c_in, c_out=c_out, c_max=c_max,
                l_final=l_final, out_dim=out_dim)
    return dict(w=w_all, aff=aff_all, pw=pw_perm, pb=pb, geom=geom)


# ---------------------------------------------------------------------------
# Forward: a single pallas_call on pre-packed parameters
# ---------------------------------------------------------------------------
def tcn_block_forward(x, prep, *, kernel_size):
    """x: (B, seq_len, input_dim) -> (B, output_dim)."""
    g = prep["geom"]
    B = x.shape[0]
    num_layers = len(g["dils"])
    l_pad_max = max(g["l_ins"][i] + 2 * g["pads"][i] for i in range(num_layers))
    flat_dim = g["l_final"] * g["c_out"]

    kern = functools.partial(
        _tcn_fused_kernel, B=B, K=kernel_size, dils=g["dils"], pads=g["pads"],
        l_ins=g["l_ins"], l_outs=g["l_outs"], c_in=g["c_in"], c_out=g["c_out"],
        c_max=g["c_max"])

    return pl.pallas_call(
        kern,
        out_shape=jax.ShapeDtypeStruct((B, g["out_dim"]), jnp.float32),
        scratch_shapes=[pltpu.VMEM((B, l_pad_max, g["c_max"]), jnp.float32),
                        pltpu.VMEM((B, l_pad_max, g["c_max"]), jnp.float32),
                        pltpu.VMEM((B, flat_dim), jnp.float32)],
    )(x.astype(jnp.float32), prep["w"], prep["aff"], prep["pw"], prep["pb"])


# ---------------------------------------------------------------------------
# Pure-JAX reference mirroring the PyTorch eval-mode forward (NCL conv layout)
# ---------------------------------------------------------------------------
def tcn_block_reference(x, params, *, kernel_size, num_layers):
    h = jnp.transpose(x.astype(jnp.float32), (0, 2, 1))  # (B, C_in, L) like x.permute(0,2,1)
    for i in range(num_layers):
        p = params["layers"][i]
        dil = 2 ** i
        pad = (kernel_size - 1) * dil
        w_oik = jnp.transpose(p["w"], (2, 1, 0))          # (C_out, C_in, K)
        h = jax.lax.conv_general_dilated(
            h, w_oik, window_strides=(1,), padding=[(pad, pad)],
            rhs_dilation=(dil,), dimension_numbers=("NCH", "OIH", "NCH"),
            precision=jax.lax.Precision.HIGHEST)
        h = h + p["b"][None, :, None]
        h = jnp.maximum(h, 0.0)
        h = ((h - p["mean"][None, :, None]) / jnp.sqrt(p["var"][None, :, None] + EPS)
             * p["gamma"][None, :, None] + p["beta"][None, :, None])
    flat = h.reshape(h.shape[0], -1)
    return jnp.dot(flat, params["pw"], precision=jax.lax.Precision.HIGHEST) + params["pb"]


# ---------------------------------------------------------------------------
# Deterministic parameter init (shapes per nn.Module.__init__)
# ---------------------------------------------------------------------------
def init_params(key, *, input_dim, output_dim, kernel_size, num_layers, sequence_length):
    layers = []
    for i in range(num_layers):
        in_ch = input_dim if i == 0 else output_dim
        key, k1, k2, k3, k4, k5, k6 = jax.random.split(key, 7)
        layers.append(dict(
            w=0.1 * jax.random.normal(k1, (kernel_size, in_ch, output_dim), jnp.float32),
            b=0.1 * jax.random.normal(k2, (output_dim,), jnp.float32),
            gamma=1.0 + 0.1 * jax.random.normal(k3, (output_dim,), jnp.float32),
            beta=0.1 * jax.random.normal(k4, (output_dim,), jnp.float32),
            mean=0.05 * jax.random.normal(k5, (output_dim,), jnp.float32),
            var=1.0 + 0.1 * jax.random.uniform(k6, (output_dim,), jnp.float32),
        ))
    # flattened_size = output_dim * L_final, L_final = S + (k-1)*(2**num_layers - 1)
    l_final = sequence_length + (kernel_size - 1) * (2 ** num_layers - 1)
    flattened_size = output_dim * l_final
    key, k1, k2 = jax.random.split(key, 3)
    pw = 0.05 * jax.random.normal(k1, (flattened_size, output_dim), jnp.float32)
    pb = 0.05 * jax.random.normal(k2, (output_dim,), jnp.float32)
    return dict(layers=layers, pw=pw, pb=pb)


if __name__ == "__main__":
    # Small config consistent with the module: batch=2, seq=16, input_dim=8,
    # output_dim=16, kernel_size=3, num_layers=2.
    B, S, IN_DIM, OUT_DIM, K, NL = 2, 16, 8, 16, 3, 2

    key = jax.random.PRNGKey(0)
    key, kx = jax.random.split(key)
    x = jax.random.normal(kx, (B, S, IN_DIM), jnp.float32)  # module input (B, seq, feat)

    params = init_params(key, input_dim=IN_DIM, output_dim=OUT_DIM,
                         kernel_size=K, num_layers=NL, sequence_length=S)
    # One-time parameter packing, outside the forward path.
    prep = prepare_params(params, kernel_size=K, num_layers=NL, sequence_length=S)

    out = tcn_block_forward(x, prep, kernel_size=K)
    out = jax.block_until_ready(out)

    ref = tcn_block_reference(x, params, kernel_size=K, num_layers=NL)
    # Matmul operands are bf16 with f32 accumulation (native MXU rate); inter-layer
    # activations stay f32, so 2e-2 is comfortably loose.
    np.testing.assert_allclose(np.asarray(out), np.asarray(ref), rtol=2e-2, atol=2e-2)

    assert out.shape == (B, OUT_DIM)
    print("KERNEL_OK")
</pallas_src>

<mosaic_0001>
module attributes {stable_mosaic.version = 11 : i64} {
  func.func @_tcn_fused_kernel(%arg0: memref<2x16x8xf32, #tpu.memory_space<vmem>>, %arg1: memref<2x48x16xbf16, #tpu.memory_space<vmem>>, %arg2: memref<2x3x16xf32, #tpu.memory_space<vmem>>, %arg3: memref<352x16xbf16, #tpu.memory_space<vmem>>, %arg4: memref<1x16xf32, #tpu.memory_space<vmem>>, %arg5: memref<2x16xf32, #tpu.memory_space<vmem>>, %arg6: memref<2x26x16xf32, #tpu.memory_space<vmem>>, %arg7: memref<2x26x16xf32, #tpu.memory_space<vmem>>, %arg8: memref<2x352xf32, #tpu.memory_space<vmem>>) attributes {dimension_semantics = [], scalar_prefetch = 0 : i64, scratch_operands = 3 : i64, tpu.core_type = #tpu.core_type<tc>} {
    %cst = arith.constant 0.000000e+00 : f32
    %0 = vector.broadcast %cst : f32 to vector<2x2x16xf32>
    %c0 = arith.constant 0 : index
    %c0_0 = arith.constant 0 : index
    %c0_1 = arith.constant 0 : index
    %1 = vector.load %arg6[%c0, %c0_0, %c0_1] : memref<2x26x16xf32, #tpu.memory_space<vmem>>, vector<2x2x16xf32>
    tpu.vector_store %arg6[%c0, %c0_0, %c0_1], %0 {strides = array<i32>} : memref<2x26x16xf32, #tpu.memory_space<vmem>>, vector<2x2x16xf32>,
    %cst_2 = arith.constant 0.000000e+00 : f32
    %2 = vector.broadcast %cst_2 : f32 to vector<2x2x16xf32>
    %c0_3 = arith.constant 0 : index
    %c18 = arith.constant 18 : index
    %c0_4 = arith.constant 0 : index
    %3 = vector.load %arg6[%c0_3, %c18, %c0_4] : memref<2x26x16xf32, #tpu.memory_space<vmem>>, vector<2x2x16xf32>
    tpu.vector_store %arg6[%c0_3, %c18, %c0_4], %2 {strides = array<i32>} : memref<2x26x16xf32, #tpu.memory_space<vmem>>, vector<2x2x16xf32>,
    %cst_5 = arith.constant 0.000000e+00 : f32
    %4 = vector.broadcast %cst_5 : f32 to vector<2x16x8xf32>
    %c0_6 = arith.constant 0 : index
    %c2 = arith.constant 2 : index
    %c8 = arith.constant 8 : index
    %5 = vector.load %arg6[%c0_6, %c2, %c8] : memref<2x26x16xf32, #tpu.memory_space<vmem>>, vector<2x16x8xf32>
    tpu.vector_store %arg6[%c0_6, %c2, %c8], %4 {strides = array<i32>} : memref<2x26x16xf32, #tpu.memory_space<vmem>>, vector<2x16x8xf32>,
    %c0_7 = arith.constant 0 : index
    %c0_8 = arith.constant 0 : index
    %c0_9 = arith.constant 0 : index
    %6 = vector.load %arg0[%c0_7, %c0_8, %c0_9] : memref<2x16x8xf32, #tpu.memory_space<vmem>>, vector<2x16x8xf32>
    %c0_10 = arith.constant 0 : index
    %c2_11 = arith.constant 2 : index
    %c0_12 = arith.constant 0 : index
    %7 = vector.load %arg6[%c0_10, %c2_11, %c0_12] : memref<2x26x16xf32, #tpu.memory_space<vmem>>, vector<2x16x8xf32>
    tpu.vector_store %arg6[%c0_10, %c2_11, %c0_12], %6 {strides = array<i32>} : memref<2x26x16xf32, #tpu.memory_space<vmem>>, vector<2x16x8xf32>,
    %c0_13 = arith.constant 0 : index
    %c0_14 = arith.constant 0 : index
    %c0_15 = arith.constant 0 : index
    %8 = vector.load %arg1[%c0_13, %c0_14, %c0_15] : memref<2x48x16xbf16, #tpu.memory_space<vmem>>, vector<1x48x16xbf16>
    %9 = vector.shape_cast %8 : vector<1x48x16xbf16> to vector<48x16xbf16>
    %c0_16 = arith.constant 0 : index
    %c0_17 = arith.constant 0 : index
    %c0_18 = arith.constant 0 : index
    %10 = vector.load %arg2[%c0_16, %c0_17, %c0_18] : memref<2x3x16xf32, #tpu.memory_space<vmem>>, vector<1x1x16xf32>
    %11 = vector.shape_cast %10 : vector<1x1x16xf32> to vector<1x16xf32>
    %c0_19 = arith.constant 0 : index
    %c1 = arith.constant 1 : index
    %c0_20 = arith.constant 0 : index
    %12 = vector.load %arg2[%c0_19, %c1, %c0_20] : memref<2x3x16xf32, #tpu.memory_space<vmem>>, vector<1x1x16xf32>
    %13 = vector.shape_cast %12 : vector<1x1x16xf32> to vector<1x16xf32>
    %c0_21 = arith.constant 0 : index
    %c2_22 = arith.constant 2 : index
    %c0_23 = arith.constant 0 : index
    %14 = vector.load %arg2[%c0_21, %c2_22, %c0_23] : memref<2x3x16xf32, #tpu.memory_space<vmem>>, vector<1x1x16xf32>
    %15 = vector.shape_cast %14 : vector<1x1x16xf32> to vector<1x16xf32>
    %cst_24 = arith.constant 0.000000e+00 : f32
    %16 = vector.broadcast %cst_24 : f32 to vector<2x4x16xf32>
    %c0_25 = arith.constant 0 : index
    %c0_26 = arith.constant 0 : index
    %c0_27 = arith.constant 0 : index
    %17 = vector.load %arg7[%c0_25, %c0_26, %c0_27] : memref<2x26x16xf32, #tpu.memory_space<vmem>>, vector<2x4x16xf32>
    tpu.vector_store %arg7[%c0_25, %c0_26, %c0_27], %16 {strides = array<i32>} : memref<2x26x16xf32, #tpu.memory_space<vmem>>, vector<2x4x16xf32>,
    %cst_28 = arith.constant 0.000000e+00 : f32
    %18 = vector.broadcast %cst_28 : f32 to vector<2x4x16xf32>
    %c0_29 = arith.constant 0 : index
    %c22 = arith.constant 22 : index
    %c0_30 = arith.constant 0 : index
    %19 = vector.load %arg7[%c0_29, %c22, %c0_30] : memref<2x26x16xf32, #tpu.memory_space<vmem>>, vector<2x4x16xf32>
    tpu.vector_store %arg7[%c0_29, %c22, %c0_30], %18 {strides = array<i32>} : memref<2x26x16xf32, #tpu.memory_space<vmem>>, vector<2x4x16xf32>,
    %c0_31 = arith.constant 0 : index
    %c0_32 = arith.constant 0 : index
    %c0_33 = arith.constant 0 : index
    %20 = vector.load %arg6[%c0_31, %c0_32, %c0_33] : memref<2x26x16xf32, #tpu.memory_space<vmem>>, vector<1x18x16xf32>
    %21 = vector.shape_cast %20 : vector<1x18x16xf32> to vector<18x16xf32>
    %c0_34 = arith.constant 0 : index
    %c1_35 = arith.constant 1 : index
    %c0_36 = arith.constant 0 : index
    %22 = vector.load %arg6[%c0_34, %c1_35, %c0_36] : memref<2x26x16xf32, #tpu.memory_space<vmem>>, vector<1x18x16xf32>
    %23 = vector.shape_cast %22 : vector<1x18x16xf32> to vector<18x16xf32>
    %c0_37 = arith.constant 0 : index
    %c2_38 = arith.constant 2 : index
    %c0_39 = arith.constant 0 : index
    %24 = vector.load %arg6[%c0_37, %c2_38, %c0_39] : memref<2x26x16xf32, #tpu.memory_space<vmem>>, vector<1x18x16xf32>
    %25 = vector.shape_cast %24 : vector<1x18x16xf32> to vector<18x16xf32>
    %26 = tpu.concatenate %21, %23, %25 in 1 : vector<18x16xf32>, vector<18x16xf32>, vector<18x16xf32> -> vector<18x48xf32>
    %27 = arith.truncf %26 : vector<18x48xf32> to vector<18x48xbf16>
    %cst_40 = arith.constant dense<0.000000e+00> : vector<18x16xf32>
    %28 = tpu.matmul %27, %9, %cst_40 {dimension_numbers = #tpu.dot_dimension_numbers<[1], [0], [0], [1], [0, 0, 1, 1], [], []>} : vector<18x48xbf16>, vector<48x16xbf16>, vector<18x16xf32> -> vector<18x16xf32>
    %29 = vector.broadcast %11 : vector<1x16xf32> to vector<18x16xf32>
    %30 = arith.addf %28, %29 : vector<18x16xf32>
    %cst_41 = arith.constant 0.000000e+00 : f32
    %31 = vector.broadcast %cst_41 : f32 to vector<18x16xf32>
    %32 = arith.maximumf %30, %31 : vector<18x16xf32>
    %33 = vector.broadcast %13 : vector<1x16xf32> to vector<18x16xf32>
    %34 = arith.mulf %32, %33 : vector<18x16xf32>
    %35 = vector.broadcast %15 : vector<1x16xf32> to vector<18x16xf32>
    %36 = arith.addf %34, %35 : vector<18x16xf32>
    %c0_42 = arith.constant 0 : index
    %c4 = arith.constant 4 : index
    %c0_43 = arith.constant 0 : index
    %37 = vector.load %arg7[%c0_42, %c4, %c0_43] : memref<2x26x16xf32, #tpu.memory_space<vmem>>, vector<1x18x16xf32>
    %38 = vector.shape_cast %37 : vector<1x18x16xf32> to vector<18x16xf32>
    %39 = vector.shape_cast %36 : vector<18x16xf32> to vector<1x18x16xf32>
    tpu.vector_store %arg7[%c0_42, %c4, %c0_43], %39 {strides = array<i32>} : memref<2x26x16xf32, #tpu.memory_space<vmem>>, vector<1x18x16xf32>,
    %c1_44 = arith.constant 1 : index
    %c0_45 = arith.constant 0 : index
    %c0_46 = arith.constant 0 : index
    %40 = vector.load %arg6[%c1_44, %c0_45, %c0_46] : memref<2x26x16xf32, #tpu.memory_space<vmem>>, vector<1x18x16xf32>
    %41 = vector.shape_cast %40 : vector<1x18x16xf32> to vector<18x16xf32>
    %c1_47 = arith.constant 1 : index
    %c1_48 = arith.constant 1 : index
    %c0_49 = arith.constant 0 : index
    %42 = vector.load %arg6[%c1_47, %c1_48, %c0_49] : memref<2x26x16xf32, #tpu.memory_space<vmem>>, vector<1x18x16xf32>
    %43 = vector.shape_cast %42 : vector<1x18x16xf32> to vector<18x16xf32>
    %c1_50 = arith.constant 1 : index
    %c2_51 = arith.constant 2 : index
    %c0_52 = arith.constant 0 : index
    %44 = vector.load %arg6[%c1_50, %c2_51, %c0_52] : memref<2x26x16xf32, #tpu.memory_space<vmem>>, vector<1x18x16xf32>
    %45 = vector.shape_cast %44 : vector<1x18x16xf32> to vector<18x16xf32>
    %46 = tpu.concatenate %41, %43, %45 in 1 : vector<18x16xf32>, vector<18x16xf32>, vector<18x16xf32> -> vector<18x48xf32>
    %47 = arith.truncf %46 : vector<18x48xf32> to vector<18x48xbf16>
    %cst_53 = arith.constant dense<0.000000e+00> : vector<18x16xf32>
    %48 = tpu.matmul %47, %9, %cst_53 {dimension_numbers = #tpu.dot_dimension_numbers<[1], [0], [0], [1], [0, 0, 1, 1], [], []>} : vector<18x48xbf16>, vector<48x16xbf16>, vector<18x16xf32> -> vector<18x16xf32>
    %49 = vector.broadcast %11 : vector<1x16xf32> to vector<18x16xf32>
    %50 = arith.addf %48, %49 : vector<18x16xf32>
    %cst_54 = arith.constant 0.000000e+00 : f32
    %51 = vector.broadcast %cst_54 : f32 to vector<18x16xf32>
    %52 = arith.maximumf %50, %51 : vector<18x16xf32>
    %53 = vector.broadcast %13 : vector<1x16xf32> to vector<18x16xf32>
    %54 = arith.mulf %52, %53 : vector<18x16xf32>
    %55 = vector.broadcast %15 : vector<1x16xf32> to vector<18x16xf32>
    %56 = arith.addf %54, %55 : vector<18x16xf32>
    %c1_55 = arith.constant 1 : index
    %c4_56 = arith.constant 4 : index
    %c0_57 = arith.constant 0 : index
    %57 = vector.load %arg7[%c1_55, %c4_56, %c0_57] : memref<2x26x16xf32, #tpu.memory_space<vmem>>, vector<1x18x16xf32>
    %58 = vector.shape_cast %57 : vector<1x18x16xf32> to vector<18x16xf32>
    %59 = vector.shape_cast %56 : vector<18x16xf32> to vector<1x18x16xf32>
    tpu.vector_store %arg7[%c1_55, %c4_56, %c0_57], %59 {strides = array<i32>} : memref<2x26x16xf32, #tpu.memory_space<vmem>>, vector<1x18x16xf32>,
    %c1_58 = arith.constant 1 : index
    %c0_59 = arith.constant 0 : index
    %c0_60 = arith.constant 0 : index
    %60 = vector.load %arg1[%c1_58, %c0_59, %c0_60] : memref<2x48x16xbf16, #tpu.memory_space<vmem>>, vector<1x48x16xbf16>
    %61 = vector.shape_cast %60 : vector<1x48x16xbf16> to vector<48x16xbf16>
    %c1_61 = arith.constant 1 : index
    %c0_62 = arith.constant 0 : index
    %c0_63 = arith.constant 0 : index
    %62 = vector.load %arg2[%c1_61, %c0_62, %c0_63] : memref<2x3x16xf32, #tpu.memory_space<vmem>>, vector<1x1x16xf32>
    %63 = vector.shape_cast %62 : vector<1x1x16xf32> to vector<1x16xf32>
    %c1_64 = arith.constant 1 : index
    %c1_65 = arith.constant 1 : index
    %c0_66 = arith.constant 0 : index
    %64 = vector.load %arg2[%c1_64, %c1_65, %c0_66] : memref<2x3x16xf32, #tpu.memory_space<vmem>>, vector<1x1x16xf32>
    %65 = vector.shape_cast %64 : vector<1x1x16xf32> to vector<1x16xf32>
    %c1_67 = arith.constant 1 : index
    %c2_68 = arith.constant 2 : index
    %c0_69 = arith.constant 0 : index
    %66 = vector.load %arg2[%c1_67, %c2_68, %c0_69] : memref<2x3x16xf32, #tpu.memory_space<vmem>>, vector<1x1x16xf32>
    %67 = vector.shape_cast %66 : vector<1x1x16xf32> to vector<1x16xf32>
    %c0_70 = arith.constant 0 : index
    %c0_71 = arith.constant 0 : index
    %c0_72 = arith.constant 0 : index
    %68 = vector.load %arg7[%c0_70, %c0_71, %c0_72] : memref<2x26x16xf32, #tpu.memory_space<vmem>>, vector<1x22x16xf32>
    %69 = vector.shape_cast %68 : vector<1x22x16xf32> to vector<22x16xf32>
    %c0_73 = arith.constant 0 : index
    %c2_74 = arith.constant 2 : index
    %c0_75 = arith.constant 0 : index
    %70 = vector.load %arg7[%c0_73, %c2_74, %c0_75] : memref<2x26x16xf32, #tpu.memory_space<vmem>>, vector<1x22x16xf32>
    %71 = vector.shape_cast %70 : vector<1x22x16xf32> to vector<22x16xf32>
    %c0_76 = arith.constant 0 : index
    %c4_77 = arith.constant 4 : index
    %c0_78 = arith.constant 0 : index
    %72 = vector.load %arg7[%c0_76, %c4_77, %c0_78] : memref<2x26x16xf32, #tpu.memory_space<vmem>>, vector<1x22x16xf32>
    %73 = vector.shape_cast %72 : vector<1x22x16xf32> to vector<22x16xf32>
    %74 = tpu.concatenate %69, %71, %73 in 1 : vector<22x16xf32>, vector<22x16xf32>, vector<22x16xf32> -> vector<22x48xf32>
    %75 = arith.truncf %74 : vector<22x48xf32> to vector<22x48xbf16>
    %cst_79 = arith.constant dense<0.000000e+00> : vector<22x16xf32>
    %76 = tpu.matmul %75, %61, %cst_79 {dimension_numbers = #tpu.dot_dimension_numbers<[1], [0], [0], [1], [0, 0, 1, 1], [], []>} : vector<22x48xbf16>, vector<48x16xbf16>, vector<22x16xf32> -> vector<22x16xf32>
    %77 = vector.broadcast %63 : vector<1x16xf32> to vector<22x16xf32>
    %78 = arith.addf %76, %77 : vector<22x16xf32>
    %cst_80 = arith.constant 0.000000e+00 : f32
    %79 = vector.broadcast %cst_80 : f32 to vector<22x16xf32>
    %80 = arith.maximumf %78, %79 : vector<22x16xf32>
    %81 = vector.broadcast %65 : vector<1x16xf32> to vector<22x16xf32>
    %82 = arith.mulf %80, %81 : vector<22x16xf32>
    %83 = vector.broadcast %67 : vector<1x16xf32> to vector<22x16xf32>
    %84 = arith.addf %82, %83 : vector<22x16xf32>
    %85 = vector.extract_strided_slice %84 {offsets = [0, 0], sizes = [1, 16], strides = [1, 1]} : vector<22x16xf32> to vector<1x16xf32>
    %c0_81 = arith.constant 0 : index
    %c0_82 = arith.constant 0 : index
    %86 = vector.load %arg8[%c0_81, %c0_82] : memref<2x352xf32, #tpu.memory_space<vmem>>, vector<1x16xf32>
    tpu.vector_store %arg8[%c0_81, %c0_82], %85 {strides = array<i32>} : memref<2x352xf32, #tpu.memory_space<vmem>>, vector<1x16xf32>,
    %87 = vector.extract_strided_slice %84 {offsets = [1, 0], sizes = [1, 16], strides = [1, 1]} : vector<22x16xf32> to vector<1x16xf32>
    %c0_83 = arith.constant 0 : index
    %c16 = arith.constant 16 : index
    %88 = vector.load %arg8[%c0_83, %c16] : memref<2x352xf32, #tpu.memory_space<vmem>>, vector<1x16xf32>
    tpu.vector_store %arg8[%c0_83, %c16], %87 {strides = array<i32>} : memref<2x352xf32, #tpu.memory_space<vmem>>, vector<1x16xf32>,
    %89 = vector.extract_strided_slice %84 {offsets = [2, 0], sizes = [1, 16], strides = [1, 1]} : vector<22x16xf32> to vector<1x16xf32>
    %c0_84 = arith.constant 0 : index
    %c32 = arith.constant 32 : index
    %90 = vector.load %arg8[%c0_84, %c32] : memref<2x352xf32, #tpu.memory_space<vmem>>, vector<1x16xf32>
    tpu.vector_store %arg8[%c0_84, %c32], %89 {strides = array<i32>} : memref<2x352xf32, #tpu.memory_space<vmem>>, vector<1x16xf32>,
    %91 = vector.extract_strided_slice %84 {offsets = [3, 0], sizes = [1, 16], strides = [1, 1]} : vector<22x16xf32> to vector<1x16xf32>
    %c0_85 = arith.constant 0 : index
    %c48 = arith.constant 48 : index
    %92 = vector.load %arg8[%c0_85, %c48] : memref<2x352xf32, #tpu.memory_space<vmem>>, vector<1x16xf32>
    tpu.vector_store %arg8[%c0_85, %c48], %91 {strides = array<i32>} : memref<2x352xf32, #tpu.memory_space<vmem>>, vector<1x16xf32>,
    %93 = vector.extract_strided_slice %84 {offsets = [4, 0], sizes = [1, 16], strides = [1, 1]} : vector<22x16xf32> to vector<1x16xf32>
    %c0_86 = arith.constant 0 : index
    %c64 = arith.constant 64 : index
    %94 = vector.load %arg8[%c0_86, %c64] : memref<2x352xf32, #tpu.memory_space<vmem>>, vector<1x16xf32>
    tpu.vector_store %arg8[%c0_86, %c64], %93 {strides = array<i32>} : memref<2x352xf32, #tpu.memory_space<vmem>>, vector<1x16xf32>,
    %95 = vector.extract_strided_slice %84 {offsets = [5, 0], sizes = [1, 16], strides = [1, 1]} : vector<22x16xf32> to vector<1x16xf32>
    %c0_87 = arith.constant 0 : index
    %c80 = arith.constant 80 : index
    %96 = vector.load %arg8[%c0_87, %c80] : memref<2x352xf32, #tpu.memory_space<vmem>>, vector<1x16xf32>
    tpu.vector_store %arg8[%c0_87, %c80], %95 {strides = array<i32>} : memref<2x352xf32, #tpu.memory_space<vmem>>, vector<1x16xf32>,
    %97 = vector.extract_strided_slice %84 {offsets = [6, 0], sizes = [1, 16], strides = [1, 1]} : vector<22x16xf32> to vector<1x16xf32>
    %c0_88 = arith.constant 0 : index
    %c96 = arith.constant 96 : index
    %98 = vector.load %arg8[%c0_88, %c96] : memref<2x352xf32, #tpu.memory_space<vmem>>, vector<1x16xf32>
    tpu.vector_store %arg8[%c0_88, %c96], %97 {strides = array<i32>} : memref<2x352xf32, #tpu.memory_space<vmem>>, vector<1x16xf32>,
    %99 = vector.extract_strided_slice %84 {offsets = [7, 0], sizes = [1, 16], strides = [1, 1]} : vector<22x16xf32> to vector<1x16xf32>
    %c0_89 = arith.constant 0 : index
    %c112 = arith.constant 112 : index
    %100 = vector.load %arg8[%c0_89, %c112] : memref<2x352xf32, #tpu.memory_space<vmem>>, vector<1x16xf32>
    tpu.vector_store %arg8[%c0_89, %c112], %99 {strides = array<i32>} : memref<2x352xf32, #tpu.memory_space<vmem>>, vector<1x16xf32>,
    %101 = vector.extract_strided_slice %84 {offsets = [8, 0], sizes = [1, 16], strides = [1, 1]} : vector<22x16xf32> to vector<1x16xf32>
    %c0_90 = arith.constant 0 : index
    %c128 = arith.constant 128 : index
    %102 = vector.load %arg8[%c0_90, %c128] : memref<2x352xf32, #tpu.memory_space<vmem>>, vector<1x16xf32>
    tpu.vector_store %arg8[%c0_90, %c128], %101 {strides = array<i32>} : memref<2x352xf32, #tpu.memory_space<vmem>>, vector<1x16xf32>,
    %103 = vector.extract_strided_slice %84 {offsets = [9, 0], sizes = [1, 16], strides = [1, 1]} : vector<22x16xf32> to vector<1x16xf32>
    %c0_91 = arith.constant 0 : index
    %c144 = arith.constant 144 : index
    %104 = vector.load %arg8[%c0_91, %c144] : memref<2x352xf32, #tpu.memory_space<vmem>>, vector<1x16xf32>
    tpu.vector_store %arg8[%c0_91, %c144], %103 {strides = array<i32>} : memref<2x352xf32, #tpu.memory_space<vmem>>, vector<1x16xf32>,
    %105 = vector.extract_strided_slice %84 {offsets = [10, 0], sizes = [1, 16], strides = [1, 1]} : vector<22x16xf32> to vector<1x16xf32>
    %c0_92 = arith.constant 0 : index
    %c160 = arith.constant 160 : index
    %106 = vector.load %arg8[%c0_92, %c160] : memref<2x352xf32, #tpu.memory_space<vmem>>, vector<1x16xf32>
    tpu.vector_store %arg8[%c0_92, %c160], %105 {strides = array<i32>} : memref<2x352xf32, #tpu.memory_space<vmem>>, vector<1x16xf32>,
    %107 = vector.extract_strided_slice %84 {offsets = [11, 0], sizes = [1, 16], strides = [1, 1]} : vector<22x16xf32> to vector<1x16xf32>
    %c0_93 = arith.constant 0 : index
    %c176 = arith.constant 176 : index
    %108 = vector.load %arg8[%c0_93, %c176] : memref<2x352xf32, #tpu.memory_space<vmem>>, vector<1x16xf32>
    tpu.vector_store %arg8[%c0_93, %c176], %107 {strides = array<i32>} : memref<2x352xf32, #tpu.memory_space<vmem>>, vector<1x16xf32>,
    %109 = vector.extract_strided_slice %84 {offsets = [12, 0], sizes = [1, 16], strides = [1, 1]} : vector<22x16xf32> to vector<1x16xf32>
    %c0_94 = arith.constant 0 : index
    %c192 = arith.constant 192 : index
    %110 = vector.load %arg8[%c0_94, %c192] : memref<2x352xf32, #tpu.memory_space<vmem>>, vector<1x16xf32>
    tpu.vector_store %arg8[%c0_94, %c192], %109 {strides = array<i32>} : memref<2x352xf32, #tpu.memory_space<vmem>>, vector<1x16xf32>,
    %111 = vector.extract_strided_slice %84 {offsets = [13, 0], sizes = [1, 16], strides = [1, 1]} : vector<22x16xf32> to vector<1x16xf32>
    %c0_95 = arith.constant 0 : index
    %c208 = arith.constant 208 : index
    %112 = vector.load %arg8[%c0_95, %c208] : memref<2x352xf32, #tpu.memory_space<vmem>>, vector<1x16xf32>
    tpu.vector_store %arg8[%c0_95, %c208], %111 {strides = array<i32>} : memref<2x352xf32, #tpu.memory_space<vmem>>, vector<1x16xf32>,
    %113 = vector.extract_strided_slice %84 {offsets = [14, 0], sizes = [1, 16], strides = [1, 1]} : vector<22x16xf32> to vector<1x16xf32>
    %c0_96 = arith.constant 0 : index
    %c224 = arith.constant 224 : index
    %114 = vector.load %arg8[%c0_96, %c224] : memref<2x352xf32, #tpu.memory_space<vmem>>, vector<1x16xf32>
    tpu.vector_store %arg8[%c0_96, %c224], %113 {strides = array<i32>} : memref<2x352xf32, #tpu.memory_space<vmem>>, vector<1x16xf32>,
    %115 = vector.extract_strided_slice %84 {offsets = [15, 0], sizes = [1, 16], strides = [1, 1]} : vector<22x16xf32> to vector<1x16xf32>
    %c0_97 = arith.constant 0 : index
    %c240 = arith.constant 240 : index
    %116 = vector.load %arg8[%c0_97, %c240] : memref<2x352xf32, #tpu.memory_space<vmem>>, vector<1x16xf32>
    tpu.vector_store %arg8[%c0_97, %c240], %115 {strides = array<i32>} : memref<2x352xf32, #tpu.memory_space<vmem>>, vector<1x16xf32>,
    %117 = vector.extract_strided_slice %84 {offsets = [16, 0], sizes = [1, 16], strides = [1, 1]} : vector<22x16xf32> to vector<1x16xf32>
    %c0_98 = arith.constant 0 : index
    %c256 = arith.constant 256 : index
    %118 = vector.load %arg8[%c0_98, %c256] : memref<2x352xf32, #tpu.memory_space<vmem>>, vector<1x16xf32>
    tpu.vector_store %arg8[%c0_98, %c256], %117 {strides = array<i32>} : memref<2x352xf32, #tpu.memory_space<vmem>>, vector<1x16xf32>,
    %119 = vector.extract_strided_slice %84 {offsets = [17, 0], sizes = [1, 16], strides = [1, 1]} : vector<22x16xf32> to vector<1x16xf32>
    %c0_99 = arith.constant 0 : index
    %c272 = arith.constant 272 : index
    %120 = vector.load %arg8[%c0_99, %c272] : memref<2x352xf32, #tpu.memory_space<vmem>>, vector<1x16xf32>
    tpu.vector_store %arg8[%c0_99, %c272], %119 {strides = array<i32>} : memref<2x352xf32, #tpu.memory_space<vmem>>, vector<1x16xf32>,
    %121 = vector.extract_strided_slice %84 {offsets = [18, 0], sizes = [1, 16], strides = [1, 1]} : vector<22x16xf32> to vector<1x16xf32>
    %c0_100 = arith.constant 0 : index
    %c288 = arith.constant 288 : index
    %122 = vector.load %arg8[%c0_100, %c288] : memref<2x352xf32, #tpu.memory_space<vmem>>, vector<1x16xf32>
    tpu.vector_store %arg8[%c0_100, %c288], %121 {strides = array<i32>} : memref<2x352xf32, #tpu.memory_space<vmem>>, vector<1x16xf32>,
    %123 = vector.extract_strided_slice %84 {offsets = [19, 0], sizes = [1, 16], strides = [1, 1]} : vector<22x16xf32> to vector<1x16xf32>
    %c0_101 = arith.constant 0 : index
    %c304 = arith.constant 304 : index
    %124 = vector.load %arg8[%c0_101, %c304] : memref<2x352xf32, #tpu.memory_space<vmem>>, vector<1x16xf32>
    tpu.vector_store %arg8[%c0_101, %c304], %123 {strides = array<i32>} : memref<2x352xf32, #tpu.memory_space<vmem>>, vector<1x16xf32>,
    %125 = vector.extract_strided_slice %84 {offsets = [20, 0], sizes = [1, 16], strides = [1, 1]} : vector<22x16xf32> to vector<1x16xf32>
    %c0_102 = arith.constant 0 : index
    %c320 = arith.constant 320 : index
    %126 = vector.load %arg8[%c0_102, %c320] : memref<2x352xf32, #tpu.memory_space<vmem>>, vector<1x16xf32>
    tpu.vector_store %arg8[%c0_102, %c320], %125 {strides = array<i32>} : memref<2x352xf32, #tpu.memory_space<vmem>>, vector<1x16xf32>,
    %127 = vector.extract_strided_slice %84 {offsets = [21, 0], sizes = [1, 16], strides = [1, 1]} : vector<22x16xf32> to vector<1x16xf32>
    %c0_103 = arith.constant 0 : index
    %c336 = arith.constant 336 : index
    %128 = vector.load %arg8[%c0_103, %c336] : memref<2x352xf32, #tpu.memory_space<vmem>>, vector<1x16xf32>
    tpu.vector_store %arg8[%c0_103, %c336], %127 {strides = array<i32>} : memref<2x352xf32, #tpu.memory_space<vmem>>, vector<1x16xf32>,
    %c1_104 = arith.constant 1 : index
    %c0_105 = arith.constant 0 : index
    %c0_106 = arith.constant 0 : index
    %129 = vector.load %arg7[%c1_104, %c0_105, %c0_106] : memref<2x26x16xf32, #tpu.memory_space<vmem>>, vector<1x22x16xf32>
    %130 = vector.shape_cast %129 : vector<1x22x16xf32> to vector<22x16xf32>
    %c1_107 = arith.constant 1 : index
    %c2_108 = arith.constant 2 : index
    %c0_109 = arith.constant 0 : index
    %131 = vector.load %arg7[%c1_107, %c2_108, %c0_109] : memref<2x26x16xf32, #tpu.memory_space<vmem>>, vector<1x22x16xf32>
    %132 = vector.shape_cast %131 : vector<1x22x16xf32> to vector<22x16xf32>
    %c1_110 = arith.constant 1 : index
    %c4_111 = arith.constant 4 : index
    %c0_112 = arith.constant 0 : index
    %133 = vector.load %arg7[%c1_110, %c4_111, %c0_112] : memref<2x26x16xf32, #tpu.memory_space<vmem>>, vector<1x22x16xf32>
    %134 = vector.shape_cast %133 : vector<1x22x16xf32> to vector<22x16xf32>
    %135 = tpu.concatenate %130, %132, %134 in 1 : vector<22x16xf32>, vector<22x16xf32>, vector<22x16xf32> -> vector<22x48xf32>
    %136 = arith.truncf %135 : vector<22x48xf32> to vector<22x48xbf16>
    %cst_113 = arith.constant dense<0.000000e+00> : vector<22x16xf32>
    %137 = tpu.matmul %136, %61, %cst_113 {dimension_numbers = #tpu.dot_dimension_numbers<[1], [0], [0], [1], [0, 0, 1, 1], [], []>} : vector<22x48xbf16>, vector<48x16xbf16>, vector<22x16xf32> -> vector<22x16xf32>
    %138 = vector.broadcast %63 : vector<1x16xf32> to vector<22x16xf32>
    %139 = arith.addf %137, %138 : vector<22x16xf32>
    %cst_114 = arith.constant 0.000000e+00 : f32
    %140 = vector.broadcast %cst_114 : f32 to vector<22x16xf32>
    %141 = arith.maximumf %139, %140 : vector<22x16xf32>
    %142 = vector.broadcast %65 : vector<1x16xf32> to vector<22x16xf32>
    %143 = arith.mulf %141, %142 : vector<22x16xf32>
    %144 = vector.broadcast %67 : vector<1x16xf32> to vector<22x16xf32>
    %145 = arith.addf %143, %144 : vector<22x16xf32>
    %146 = vector.extract_strided_slice %145 {offsets = [0, 0], sizes = [1, 16], strides = [1, 1]} : vector<22x16xf32> to vector<1x16xf32>
    %c1_115 = arith.constant 1 : index
    %c0_116 = arith.constant 0 : index
    %147 = vector.load %arg8[%c1_115, %c0_116] : memref<2x352xf32, #tpu.memory_space<vmem>>, vector<1x16xf32>
    tpu.vector_store %arg8[%c1_115, %c0_116], %146 {strides = array<i32>} : memref<2x352xf32, #tpu.memory_space<vmem>>, vector<1x16xf32>,
    %148 = vector.extract_strided_slice %145 {offsets = [1, 0], sizes = [1, 16], strides = [1, 1]} : vector<22x16xf32> to vector<1x16xf32>
    %c1_117 = arith.constant 1 : index
    %c16_118 = arith.constant 16 : index
    %149 = vector.load %arg8[%c1_117, %c16_118] : memref<2x352xf32, #tpu.memory_space<vmem>>, vector<1x16xf32>
    tpu.vector_store %arg8[%c1_117, %c16_118], %148 {strides = array<i32>} : memref<2x352xf32, #tpu.memory_space<vmem>>, vector<1x16xf32>,
    %150 = vector.extract_strided_slice %145 {offsets = [2, 0], sizes = [1, 16], strides = [1, 1]} : vector<22x16xf32> to vector<1x16xf32>
    %c1_119 = arith.constant 1 : index
    %c32_120 = arith.constant 32 : index
    %151 = vector.load %arg8[%c1_119, %c32_120] : memref<2x352xf32, #tpu.memory_space<vmem>>, vector<1x16xf32>
    tpu.vector_store %arg8[%c1_119, %c32_120], %150 {strides = array<i32>} : memref<2x352xf32, #tpu.memory_space<vmem>>, vector<1x16xf32>,
    %152 = vector.extract_strided_slice %145 {offsets = [3, 0], sizes = [1, 16], strides = [1, 1]} : vector<22x16xf32> to vector<1x16xf32>
    %c1_121 = arith.constant 1 : index
    %c48_122 = arith.constant 48 : index
    %153 = vector.load %arg8[%c1_121, %c48_122] : memref<2x352xf32, #tpu.memory_space<vmem>>, vector<1x16xf32>
    tpu.vector_store %arg8[%c1_121, %c48_122], %152 {strides = array<i32>} : memref<2x352xf32, #tpu.memory_space<vmem>>, vector<1x16xf32>,
    %154 = vector.extract_strided_slice %145 {offsets = [4, 0], sizes = [1, 16], strides = [1, 1]} : vector<22x16xf32> to vector<1x16xf32>
    %c1_123 = arith.constant 1 : index
    %c64_124 = arith.constant 64 : index
    %155 = vector.load %arg8[%c1_123, %c64_124] : memref<2x352xf32, #tpu.memory_space<vmem>>, vector<1x16xf32>
    tpu.vector_store %arg8[%c1_123, %c64_124], %154 {strides = array<i32>} : memref<2x352xf32, #tpu.memory_space<vmem>>, vector<1x16xf32>,
    %156 = vector.extract_strided_slice %145 {offsets = [5, 0], sizes = [1, 16], strides = [1, 1]} : vector<22x16xf32> to vector<1x16xf32>
    %c1_125 = arith.constant 1 : index
    %c80_126 = arith.constant 80 : index
    %157 = vector.load %arg8[%c1_125, %c80_126] : memref<2x352xf32, #tpu.memory_space<vmem>>, vector<1x16xf32>
    tpu.vector_store %arg8[%c1_125, %c80_126], %156 {strides = array<i32>} : memref<2x352xf32, #tpu.memory_space<vmem>>, vector<1x16xf32>,
    %158 = vector.extract_strided_slice %145 {offsets = [6, 0], sizes = [1, 16], strides = [1, 1]} : vector<22x16xf32> to vector<1x16xf32>
    %c1_127 = arith.constant 1 : index
    %c96_128 = arith.constant 96 : index
    %159 = vector.load %arg8[%c1_127, %c96_128] : memref<2x352xf32, #tpu.memory_space<vmem>>, vector<1x16xf32>
    tpu.vector_store %arg8[%c1_127, %c96_128], %158 {strides = array<i32>} : memref<2x352xf32, #tpu.memory_space<vmem>>, vector<1x16xf32>,
    %160 = vector.extract_strided_slice %145 {offsets = [7, 0], sizes = [1, 16], strides = [1, 1]} : vector<22x16xf32> to vector<1x16xf32>
    %c1_129 = arith.constant 1 : index
    %c112_130 = arith.constant 112 : index
    %161 = vector.load %arg8[%c1_129, %c112_130] : memref<2x352xf32, #tpu.memory_space<vmem>>, vector<1x16xf32>
    tpu.vector_store %arg8[%c1_129, %c112_130], %160 {strides = array<i32>} : memref<2x352xf32, #tpu.memory_space<vmem>>, vector<1x16xf32>,
    %162 = vector.extract_strided_slice %145 {offsets = [8, 0], sizes = [1, 16], strides = [1, 1]} : vector<22x16xf32> to vector<1x16xf32>
    %c1_131 = arith.constant 1 : index
    %c128_132 = arith.constant 128 : index
    %163 = vector.load %arg8[%c1_131, %c128_132] : memref<2x352xf32, #tpu.memory_space<vmem>>, vector<1x16xf32>
    tpu.vector_store %arg8[%c1_131, %c128_132], %162 {strides = array<i32>} : memref<2x352xf32, #tpu.memory_space<vmem>>, vector<1x16xf32>,
    %164 = vector.extract_strided_slice %145 {offsets = [9, 0], sizes = [1, 16], strides = [1, 1]} : vector<22x16xf32> to vector<1x16xf32>
    %c1_133 = arith.constant 1 : index
    %c144_134 = arith.constant 144 : index
    %165 = vector.load %arg8[%c1_133, %c144_134] : memref<2x352xf32, #tpu.memory_space<vmem>>, vector<1x16xf32>
    tpu.vector_store %arg8[%c1_133, %c144_134], %164 {strides = array<i32>} : memref<2x352xf32, #tpu.memory_space<vmem>>, vector<1x16xf32>,
    %166 = vector.extract_strided_slice %145 {offsets = [10, 0], sizes = [1, 16], strides = [1, 1]} : vector<22x16xf32> to vector<1x16xf32>
    %c1_135 = arith.constant 1 : index
    %c160_136 = arith.constant 160 : index
    %167 = vector.load %arg8[%c1_135, %c160_136] : memref<2x352xf32, #tpu.memory_space<vmem>>, vector<1x16xf32>
    tpu.vector_store %arg8[%c1_135, %c160_136], %166 {strides = array<i32>} : memref<2x352xf32, #tpu.memory_space<vmem>>, vector<1x16xf32>,
    %168 = vector.extract_strided_slice %145 {offsets = [11, 0], sizes = [1, 16], strides = [1, 1]} : vector<22x16xf32> to vector<1x16xf32>
    %c1_137 = arith.constant 1 : index
    %c176_138 = arith.constant 176 : index
    %169 = vector.load %arg8[%c1_137, %c176_138] : memref<2x352xf32, #tpu.memory_space<vmem>>, vector<1x16xf32>
    tpu.vector_store %arg8[%c1_137, %c176_138], %168 {strides = array<i32>} : memref<2x352xf32, #tpu.memory_space<vmem>>, vector<1x16xf32>,
    %170 = vector.extract_strided_slice %145 {offsets = [12, 0], sizes = [1, 16], strides = [1, 1]} : vector<22x16xf32> to vector<1x16xf32>
    %c1_139 = arith.constant 1 : index
    %c192_140 = arith.constant 192 : index
    %171 = vector.load %arg8[%c1_139, %c192_140] : memref<2x352xf32, #tpu.memory_space<vmem>>, vector<1x16xf32>
    tpu.vector_store %arg8[%c1_139, %c192_140], %170 {strides = array<i32>} : memref<2x352xf32, #tpu.memory_space<vmem>>, vector<1x16xf32>,
    %172 = vector.extract_strided_slice %145 {offsets = [13, 0], sizes = [1, 16], strides = [1, 1]} : vector<22x16xf32> to vector<1x16xf32>
    %c1_141 = arith.constant 1 : index
    %c208_142 = arith.constant 208 : index
    %173 = vector.load %arg8[%c1_141, %c208_142] : memref<2x352xf32, #tpu.memory_space<vmem>>, vector<1x16xf32>
    tpu.vector_store %arg8[%c1_141, %c208_142], %172 {strides = array<i32>} : memref<2x352xf32, #tpu.memory_space<vmem>>, vector<1x16xf32>,
    %174 = vector.extract_strided_slice %145 {offsets = [14, 0], sizes = [1, 16], strides = [1, 1]} : vector<22x16xf32> to vector<1x16xf32>
    %c1_143 = arith.constant 1 : index
    %c224_144 = arith.constant 224 : index
    %175 = vector.load %arg8[%c1_143, %c224_144] : memref<2x352xf32, #tpu.memory_space<vmem>>, vector<1x16xf32>
    tpu.vector_store %arg8[%c1_143, %c224_144], %174 {strides = array<i32>} : memref<2x352xf32, #tpu.memory_space<vmem>>, vector<1x16xf32>,
    %176 = vector.extract_strided_slice %145 {offsets = [15, 0], sizes = [1, 16], strides = [1, 1]} : vector<22x16xf32> to vector<1x16xf32>
    %c1_145 = arith.constant 1 : index
    %c240_146 = arith.constant 240 : index
    %177 = vector.load %arg8[%c1_145, %c240_146] : memref<2x352xf32, #tpu.memory_space<vmem>>, vector<1x16xf32>
    tpu.vector_store %arg8[%c1_145, %c240_146], %176 {strides = array<i32>} : memref<2x352xf32, #tpu.memory_space<vmem>>, vector<1x16xf32>,
    %178 = vector.extract_strided_slice %145 {offsets = [16, 0], sizes = [1, 16], strides = [1, 1]} : vector<22x16xf32> to vector<1x16xf32>
    %c1_147 = arith.constant 1 : index
    %c256_148 = arith.constant 256 : index
    %179 = vector.load %arg8[%c1_147, %c256_148] : memref<2x352xf32, #tpu.memory_space<vmem>>, vector<1x16xf32>
    tpu.vector_store %arg8[%c1_147, %c256_148], %178 {strides = array<i32>} : memref<2x352xf32, #tpu.memory_space<vmem>>, vector<1x16xf32>,
    %180 = vector.extract_strided_slice %145 {offsets = [17, 0], sizes = [1, 16], strides = [1, 1]} : vector<22x16xf32> to vector<1x16xf32>
    %c1_149 = arith.constant 1 : index
    %c272_150 = arith.constant 272 : index
    %181 = vector.load %arg8[%c1_149, %c272_150] : memref<2x352xf32, #tpu.memory_space<vmem>>, vector<1x16xf32>
    tpu.vector_store %arg8[%c1_149, %c272_150], %180 {strides = array<i32>} : memref<2x352xf32, #tpu.memory_space<vmem>>, vector<1x16xf32>,
    %182 = vector.extract_strided_slice %145 {offsets = [18, 0], sizes = [1, 16], strides = [1, 1]} : vector<22x16xf32> to vector<1x16xf32>
    %c1_151 = arith.constant 1 : index
    %c288_152 = arith.constant 288 : index
    %183 = vector.load %arg8[%c1_151, %c288_152] : memref<2x352xf32, #tpu.memory_space<vmem>>, vector<1x16xf32>
    tpu.vector_store %arg8[%c1_151, %c288_152], %182 {strides = array<i32>} : memref<2x352xf32, #tpu.memory_space<vmem>>, vector<1x16xf32>,
    %184 = vector.extract_strided_slice %145 {offsets = [19, 0], sizes = [1, 16], strides = [1, 1]} : vector<22x16xf32> to vector<1x16xf32>
    %c1_153 = arith.constant 1 : index
    %c304_154 = arith.constant 304 : index
    %185 = vector.load %arg8[%c1_153, %c304_154] : memref<2x352xf32, #tpu.memory_space<vmem>>, vector<1x16xf32>
    tpu.vector_store %arg8[%c1_153, %c304_154], %184 {strides = array<i32>} : memref<2x352xf32, #tpu.memory_space<vmem>>, vector<1x16xf32>,
    %186 = vector.extract_strided_slice %145 {offsets = [20, 0], sizes = [1, 16], strides = [1, 1]} : vector<22x16xf32> to vector<1x16xf32>
    %c1_155 = arith.constant 1 : index
    %c320_156 = arith.constant 320 : index
    %187 = vector.load %arg8[%c1_155, %c320_156] : memref<2x352xf32, #tpu.memory_space<vmem>>, vector<1x16xf32>
    tpu.vector_store %arg8[%c1_155, %c320_156], %186 {strides = array<i32>} : memref<2x352xf32, #tpu.memory_space<vmem>>, vector<1x16xf32>,
    %188 = vector.extract_strided_slice %145 {offsets = [21, 0], sizes = [1, 16], strides = [1, 1]} : vector<22x16xf32> to vector<1x16xf32>
    %c1_157 = arith.constant 1 : index
    %c336_158 = arith.constant 336 : index
    %189 = vector.load %arg8[%c1_157, %c336_158] : memref<2x352xf32, #tpu.memory_space<vmem>>, vector<1x16xf32>
    tpu.vector_store %arg8[%c1_157, %c336_158], %188 {strides = array<i32>} : memref<2x352xf32, #tpu.memory_space<vmem>>, vector<1x16xf32>,
    %c0_159 = arith.constant 0 : index
    %c0_160 = arith.constant 0 : index
    %190 = vector.load %arg8[%c0_159, %c0_160] : memref<2x352xf32, #tpu.memory_space<vmem>>, vector<2x352xf32>
    %191 = arith.truncf %190 : vector<2x352xf32> to vector<2x352xbf16>
    %c0_161 = arith.constant 0 : index
    %c0_162 = arith.constant 0 : index
    %192 = vector.load %arg3[%c0_161, %c0_162] : memref<352x16xbf16, #tpu.memory_space<vmem>>, vector<352x16xbf16>
    %cst_163 = arith.constant dense<0.000000e+00> : vector<2x16xf32>
    %193 = tpu.matmul %191, %192, %cst_163 {dimension_numbers = #tpu.dot_dimension_numbers<[1], [0], [0], [1], [0, 0, 1, 1], [], []>} : vector<2x352xbf16>, vector<352x16xbf16>, vector<2x16xf32> -> vector<2x16xf32>
    %c0_164 = arith.constant 0 : index
    %c0_165 = arith.constant 0 : index
    %194 = vector.load %arg4[%c0_164, %c0_165] : memref<1x16xf32, #tpu.memory_space<vmem>>, vector<1x16xf32>
    %195 = vector.broadcast %194 : vector<1x16xf32> to vector<2x16xf32>
    %196 = arith.addf %193, %195 : vector<2x16xf32>
    %c0_166 = arith.constant 0 : index
    %c0_167 = arith.constant 0 : index
    %197 = vector.load %arg5[%c0_166, %c0_167] : memref<2x16xf32, #tpu.memory_space<vmem>>, vector<2x16xf32>
    tpu.vector_store %arg5[%c0_166, %c0_167], %196 {strides = array<i32>} : memref<2x16xf32, #tpu.memory_space<vmem>>, vector<2x16xf32>,
    return
  }
}

</mosaic_0001>

<llo_original>
// kernel: tpu_custom_call.1
$region0: #{tpu_custom_call.1}
  #allocation0 [shape = 'u32[]', space=smem, size = 0x4, offset = 0x4, fixed_abs, tag = 'smem constant byte address 0x4 - core index']
  #allocation1 [shape = 'u32[144,128]{1,0:T(1,128)}', space=vmem, size = 0x12000, scoped, tag = 'internal scratch']
  #allocation2 [shape = 'f32[2,26,16]{2,1,0:T(8,128)}', space=vmem, size = 0x8000, scoped, tag = 'scratch operand']
  #allocation3 [shape = 'f32[2,26,16]{2,1,0:T(8,128)}', space=vmem, size = 0x8000, scoped, tag = 'scratch operand']
  #allocation4 [shape = 'f32[2,352]{1,0:T(2,128)}', space=vmem, size = 0xc00, scoped, tag = 'scratch operand']
  %s0 = inlined_call_operand.vmem [shape: f32[2,16,8], index: 0, kind: input, shape index: {}]
  %s1 = inlined_call_operand.vmem [shape: bf16[2,48,16], index: 1, kind: input, shape index: {}]
  %s2 = inlined_call_operand.vmem [shape: f32[2,3,16], index: 2, kind: input, shape index: {}]
  %s3 = inlined_call_operand.vmem [shape: bf16[352,16], index: 3, kind: input, shape index: {}]
  %s4 = inlined_call_operand.vmem [shape: f32[1,16], index: 4, kind: input, shape index: {}]
  %s5 = inlined_call_operand.hbm [shape: f32[2,16], index: 5, kind: output, shape index: {}]
  %s6 = sld [smem:[#allocation0]]
  $region30: #{tpu_custom_call.1} parent=0
    _
  %s8 = ssub.s32 1, %s6
  %s9 = scalar_select 0, %s8, %s6
  $region1: #{tpu_custom_call.1} parent=0
    #allocation5 [shape = 'u8[1024]{0}', space=vmem, size = 0x400, scoped, tag = 'output window, operand 0, single buffered']
    #allocation6 [shape = 's32[1]{0}', space=sflag, size = 0x4, scoped, tag = 'scoped memory for tpu_custom_call.1']
    %10 = vsyncpa [#allocation6], 0
    // Predicated region
    $region2: #{tpu_custom_call.1} parent=1 // pred_check
      _
    $region3: #{tpu_custom_call.1} parent=1 // pred_check_branch
      %12 = sbr.rel (0) target = $region5
    $region4: #{tpu_custom_call.1} parent=1 // pred_region
      _
    $region5: #{tpu_custom_call.1} parent=1 // pred_fallthru
      _
    // Predicated region
    $region6: #{tpu_custom_call.1} parent=1 // pred_check
      _
    $region7: #{tpu_custom_call.1} parent=1 // pred_check_branch
      %14 = sbr.rel (0) target = $region9
    $region8: #{tpu_custom_call.1} parent=1 // pred_region
      _
    $region9: #{tpu_custom_call.1} parent=1 // pred_fallthru
      _
    // Predicated region
    $region10: #{tpu_custom_call.1} parent=1 // pred_check
      _
    $region11: #{tpu_custom_call.1} parent=1 // pred_check_branch
      %16 = sbr.rel (0) target = $region13
    $region12: #{tpu_custom_call.1} parent=1 // pred_region
      _
    $region13: #{tpu_custom_call.1} parent=1 // pred_fallthru
      _
    // Predicated region
    $region14: #{tpu_custom_call.1} parent=1 // pred_check
      _
    $region15: #{tpu_custom_call.1} parent=1 // pred_check_branch
      %18 = sbr.rel (0) target = $region17
    $region16: #{tpu_custom_call.1} parent=1 // pred_region
      _
    $region17: #{tpu_custom_call.1} parent=1 // pred_fallthru
      _
    // Predicated region
    $region18: #{tpu_custom_call.1} parent=1 // pred_check
      _
    $region19: #{tpu_custom_call.1} parent=1 // pred_check_branch
      %20 = sbr.rel (0) target = $region21
    $region20: #{tpu_custom_call.1} parent=1 // pred_region
      _
    $region21: #{tpu_custom_call.1} parent=1 // pred_fallthru
      _
    %vm22 = vcmask 123904
    %23 = vst.msk [vmem:[#allocation2] sm:$0x3] %vm22, 0.0
    %24 = vst.msk [vmem:[#allocation2 + $0x20] sm:$0x3] %vm22, 0.0
    %25 = vst.msk [vmem:[#allocation2 + $0x12] sm:$0x3] %vm22, 0.0
    %26 = vst.msk [vmem:[#allocation2 + $0x32] sm:$0x3] %vm22, 0.0
    %vm27 = vcmask 130112
    %28 = vst.msk [vmem:[#allocation2 + $0x2] sm:$0xff] %vm27, 0.0
    %29 = vst.msk [vmem:[#allocation2 + $0xa] sm:$0xff] %vm27, 0.0
    %30 = vst.msk [vmem:[#allocation2 + $0x22] sm:$0xff] %vm27, 0.0
    %31 = vst.msk [vmem:[#allocation2 + $0x2a] sm:$0xff] %vm27, 0.0
    %v32 = vld [vmem:[%s0] sm:$0xff]
    %v33 = vld [vmem:[%s0 + $0x8] sm:$0xff]
    %v34 = vld [vmem:[%s0 + $0x10] sm:$0xff]
    %v35 = vld [vmem:[%s0 + $0x18] sm:$0xff]
    %vm36 = vcmask 64512
    %37 = vst.msk [vmem:[#allocation2 + $0x2] sm:$0xff] %vm36, %v32
    %38 = vst.msk [vmem:[#allocation2 + $0xa] sm:$0xff] %vm36, %v33
    %39 = vst.msk [vmem:[#allocation2 + $0x22] sm:$0xff] %vm36, %v34
    %40 = vst.msk [vmem:[#allocation2 + $0x2a] sm:$0xff] %vm36, %v35
    %v41 = vld [vmem:[%s1] sm:$0xf]
    %v42 = vld [vmem:[%s1 + $0x4] sm:$0xf]
    %v43 = vld [vmem:[%s1 + $0x8] sm:$0xf]
    %v44 = vld [vmem:[%s1 + $0xc] sm:$0xf]
    %v45 = vld [vmem:[%s1 + $0x10] sm:$0xf]
    %v46 = vld [vmem:[%s1 + $0x14] sm:$0xf]
    %v47 = vld [vmem:[%s2] sm:$0x1]
    %v48 = vld [vmem:[%s2 + $0x1] sm:$0x1]
    %v49 = vld [vmem:[%s2 + $0x2] sm:$0x1]
    %vm50 = vcmask 125952
    %51 = vst.msk [vmem:[#allocation3] sm:$0xf] %vm50, 0.0
    %52 = vst.msk [vmem:[#allocation3 + $0x20] sm:$0xf] %vm50, 0.0
    %53 = vst.msk [vmem:[#allocation3 + $0x16] sm:$0xf] %vm50, 0.0
    %54 = vst.msk [vmem:[#allocation3 + $0x36] sm:$0xf] %vm50, 0.0
    %v55 = vld [vmem:[#allocation2] sm:$0xff]
    %v56 = vld [vmem:[#allocation2 + $0x8] sm:$0xff]
    %v57 = vld [vmem:[#allocation2 + $0x10] sm:$0x3]
    %v58 = vld [vmem:[#allocation2 + $0x1] sm:$0xff]
    %v59 = vld [vmem:[#allocation2 + $0x9] sm:$0xff]
    %v60 = vld [vmem:[#allocation2 + $0x11] sm:$0x3]
    %v61 = vld [vmem:[#allocation2 + $0x2] sm:$0xff]
    %v62 = vld [vmem:[#allocation2 + $0xa] sm:$0xff]
    %v63 = vld [vmem:[#allocation2 + $0x12] sm:$0x3]
    %67 = vrot.lane.b32.xlu0 %v58, 16
    %v68 = vpop.permute.xlu0 %67
    %69 = vrot.lane.b32.xlu0 %v59, 16
    %v70 = vpop.permute.xlu0 %69
    %71 = vrot.lane.b32.xlu0 %v60, 16
    %v72 = vpop.permute.xlu0 %71
    %79 = vrot.lane.b32.xlu0 %v61, 32
    %v80 = vpop.permute.xlu0 %79
    %81 = vrot.lane.b32.xlu0 %v62, 32
    %v82 = vpop.permute.xlu0 %81
    %83 = vrot.lane.b32.xlu0 %v63, 32
    %v84 = vpop.permute.xlu0 %83
    %vm88 = vcmask 130048
    %v89 = vsel %vm88, %v55, %v68
    %v90 = vsel %vm88, %v56, %v70
    %v91 = vsel %vm88, %v57, %v72
    %vm92 = vcmask 261120
    %v93 = vsel %vm92, %v89, %v80
    %v94 = vsel %vm92, %v90, %v82
    %v95 = vsel %vm92, %v91, %v84
    %v96 = vpack.c.bf16 %v94, %v93
    %v97 = vpack.c.bf16 %v95, %v95
    %v98 = vlaneseq
    %v99 = vshrl.u32 %v98, 7
    %v100 = vsub.s32 0, %v99
    %v101 = vrot.slane %v47, %v100
    %v108 = vunpack.c.l.b16 %v41
    %v109 = vunpack.c.l.b16 %v42
    %v110 = vunpack.c.l.b16 %v43
    %v111 = vunpack.c.l.b16 %v44
    %v112 = vunpack.c.l.b16 %v45
    %v113 = vunpack.c.l.b16 %v46
    %v114 = vpack.c.b16 %v109, %v108
    %v115 = vpack.c.b16 %v111, %v110
    %v116 = vpack.c.b16 %v113, %v112
    %vm120 = vcmask 392192
    %v122 = vsel %vm120, %v96, 0
    %v125 = vsel %vm120, %v97, 0
    %127 = vmatprep.subr.bf16.mxu0 0
    %128 = vmatpush1.bf16.msra.mxu0 %v114
    %129 = vmatprep.subr.bf16.mxu0 0
    %130 = vmatpush1.bf16.msra.mxu0 %v115
    %131 = vmatprep.subr.bf16.mxu0 0
    %132 = vmatpush1.bf16.msra.mxu0 %v116
    %133 = vmatprep.subr.bf16.mxu0 0
    %134 = vmatpush1.bf16.msra.mxu0 0
    %135 = vmatprep.subr.bf16.mxu0 0
    %136 = vmatpush1.bf16.msra.mxu0 0
    %137 = vmatprep.subr.bf16.mxu0 0
    %138 = vmatpush1.bf16.msra.mxu0 0
    %139 = vmatprep.subr.bf16.mxu0 0
    %140 = vmatpush1.bf16.msra.mxu0 0
    %141 = vmatprep.subr.bf16.mxu0 0
    %142 = vmatpush1.bf16.msra.mxu0 0
    %143 = vmatprep.subr.bf16.mxu0 0
    %144 = vmatpush1.bf16.msra.mxu0 0
    %145 = vmatprep.subr.bf16.mxu0 0
    %146 = vmatpush1.bf16.msra.mxu0 0
    %147 = vmatprep.subr.bf16.mxu0 0
    %148 = vmatpush1.bf16.msra.mxu0 0
    %149 = vmatprep.subr.bf16.mxu0 0
    %150 = vmatpush1.bf16.msra.mxu0 0
    %151 = vmatprep.subr.bf16.mxu0 0
    %152 = vmatpush1.bf16.msra.mxu0 0
    %153 = vmatprep.subr.bf16.mxu0 0
    %154 = vmatpush1.bf16.msra.mxu0 0
    %155 = vmatprep.subr.bf16.mxu0 0
    %156 = vmatpush1.bf16.msra.mxu0 0
    %157 = vmatprep.subr.bf16.mxu0 0
    %158 = vmatpush1.bf16.msra.mxu0 0
    %159 = vmatprep.mubr.bf16.mxu0 0
    %160 = vmatmul.mubr.bf16.gmra.mrb[0].mxu0 %v122
    %v161 = vpop.f32.mrb[0].mxu0
    %v162 = vadd.f32 %v101, %v161
    %v163 = vpop.f32.mrb[0].mxu0
    %v164 = vpop.f32.mrb[0].mxu0
    %v165 = vadd.f32 %v101, %v164
    %v166 = vpop.f32.mrb[0].mxu0
    %167 = vmatprep.mubr.bf16.mxu0 0
    %168 = vmatmul.mubr.bf16.gmra.mrb[0].mxu0 %v125
    %v169 = vpop.f32.mrb[0].mxu0
    %v170 = vadd.f32 %v101, %v169
    %v171 = vpop.f32.mrb[0].mxu0
    %v172 = vpop.f32.mrb[0].mxu0
    %v173 = vpop.f32.mrb[0].mxu0
    %174 = vdwg.mxu0
    %v175 = vmax.f32 %v162, 0.0
    %v176 = vmax.f32 %v165, 0.0
    %v177 = vmax.f32 %v170, 0.0
    %v178 = vlaneseq
    %v179 = vshrl.u32 %v178, 7
    %v180 = vsub.s32 0, %v179
    %v181 = vrot.slane %v48, %v180
    %v182 = vmul.f32 %v175, %v181
    %v183 = vmul.f32 %v176, %v181
    %v184 = vmul.f32 %v177, %v181
    %v185 = vlaneseq
    %v186 = vshrl.u32 %v185, 7
    %v187 = vsub.s32 0, %v186
    %v188 = vrot.slane %v49, %v187
    %v189 = vadd.f32 %v182, %v188
    %v190 = vadd.f32 %v183, %v188
    %v191 = vadd.f32 %v184, %v188
    %192 = vst.msk [vmem:[#allocation3 + $0x4] sm:$0xff] %vm88, %v189
    %193 = vst.msk [vmem:[#allocation3 + $0xc] sm:$0xff] %vm88, %v190
    %194 = vst.msk [vmem:[#allocation3 + $0x14] sm:$0x3] %vm22, %v191
    %s195 = scalar_lea.vmem [#allocation2], 32
    %v196 = vld [vmem:[%s195] sm:$0xff]
    %v197 = vld [vmem:[%s195 + $0x8] sm:$0xff]
    %v198 = vld [vmem:[%s195 + $0x10] sm:$0x3]
    %v199 = vld [vmem:[%s195 + $0x1] sm:$0xff]
    %v200 = vld [vmem:[%s195 + $0x9] sm:$0xff]
    %v201 = vld [vmem:[%s195 + $0x11] sm:$0x3]
    %v202 = vld [vmem:[%s195 + $0x2] sm:$0xff]
    %v203 = vld [vmem:[%s195 + $0xa] sm:$0xff]
    %v204 = vld [vmem:[%s195 + $0x12] sm:$0x3]
    %208 = vrot.lane.b32.xlu0 %v199, 16
    %v209 = vpop.permute.xlu0 %208
    %210 = vrot.lane.b32.xlu0 %v200, 16
    %v211 = vpop.permute.xlu0 %210
    %212 = vrot.lane.b32.xlu0 %v201, 16
    %v213 = vpop.permute.xlu0 %212
    %220 = vrot.lane.b32.xlu0 %v202, 32
    %v221 = vpop.permute.xlu0 %220
    %222 = vrot.lane.b32.xlu0 %v203, 32
    %v223 = vpop.permute.xlu0 %222
    %224 = vrot.lane.b32.xlu0 %v204, 32
    %v225 = vpop.permute.xlu0 %224
    %v229 = vsel %vm88, %v196, %v209
    %v230 = vsel %vm88, %v197, %v211
    %v231 = vsel %vm88, %v198, %v213
    %v232 = vsel %vm92, %v229, %v221
    %v233 = vsel %vm92, %v230, %v223
    %v234 = vsel %vm92, %v231, %v225
    %v235 = vpack.c.bf16 %v233, %v232
    %v236 = vpack.c.bf16 %v234, %v234
    %v238 = vsel %vm120, %v235, 0
    %v241 = vsel %vm120, %v236, 0
    %243 = vmatprep.subr.bf16.mxu0 0
    %244 = vmatpush1.bf16.msra.mxu0 %v114
    %245 = vmatprep.subr.bf16.mxu0 0
    %246 = vmatpush1.bf16.msra.mxu0 %v115
    %247 = vmatprep.subr.bf16.mxu0 0
    %248 = vmatpush1.bf16.msra.mxu0 %v116
    %249 = vmatprep.subr.bf16.mxu0 0
    %250 = vmatpush1.bf16.msra.mxu0 0
    %251 = vmatprep.subr.bf16.mxu0 0
    %252 = vmatpush1.bf16.msra.mxu0 0
    %253 = vmatprep.subr.bf16.mxu0 0
    %254 = vmatpush1.bf16.msra.mxu0 0
    %255 = vmatprep.subr.bf16.mxu0 0
    %256 = vmatpush1.bf16.msra.mxu0 0
    %257 = vmatprep.subr.bf16.mxu0 0
    %258 = vmatpush1.bf16.msra.mxu0 0
    %259 = vmatprep.subr.bf16.mxu0 0
    %260 = vmatpush1.bf16.msra.mxu0 0
    %261 = vmatprep.subr.bf16.mxu0 0
    %262 = vmatpush1.bf16.msra.mxu0 0
    %263 = vmatprep.subr.bf16.mxu0 0
    %264 = vmatpush1.bf16.msra.mxu0 0
    %265 = vmatprep.subr.bf16.mxu0 0
    %266 = vmatpush1.bf16.msra.mxu0 0
    %267 = vmatprep.subr.bf16.mxu0 0
    %268 = vmatpush1.bf16.msra.mxu0 0
    %269 = vmatprep.subr.bf16.mxu0 0
    %270 = vmatpush1.bf16.msra.mxu0 0
    %271 = vmatprep.subr.bf16.mxu0 0
    %272 = vmatpush1.bf16.msra.mxu0 0
    %273 = vmatprep.subr.bf16.mxu0 0
    %274 = vmatpush1.bf16.msra.mxu0 0
    %275 = vmatprep.mubr.bf16.mxu0 0
    %276 = vmatmul.mubr.bf16.gmra.mrb[0].mxu0 %v238
    %v277 = vpop.f32.mrb[0].mxu0
    %v278 = vadd.f32 %v101, %v277
    %v279 = vpop.f32.mrb[0].mxu0
    %v280 = vpop.f32.mrb[0].mxu0
    %v281 = vadd.f32 %v101, %v280
    %v282 = vpop.f32.mrb[0].mxu0
    %283 = vmatprep.mubr.bf16.mxu0 0
    %284 = vmatmul.mubr.bf16.gmra.mrb[0].mxu0 %v241
    %v285 = vpop.f32.mrb[0].mxu0
    %v286 = vadd.f32 %v101, %v285
    %v287 = vpop.f32.mrb[0].mxu0
    %v288 = vpop.f32.mrb[0].mxu0
    %v289 = vpop.f32.mrb[0].mxu0
    %290 = vdwg.mxu0
    %v291 = vmax.f32 %v278, 0.0
    %v292 = vmax.f32 %v281, 0.0
    %v293 = vmax.f32 %v286, 0.0
    %v294 = vmul.f32 %v291, %v181
    %v295 = vmul.f32 %v292, %v181
    %v296 = vmul.f32 %v293, %v181
    %v297 = vadd.f32 %v294, %v188
    %v298 = vadd.f32 %v295, %v188
    %v299 = vadd.f32 %v296, %v188
    %s300 = scalar_lea.vmem [#allocation3], 32
    %301 = vst.msk [vmem:[%s300 + $0x4] sm:$0xff] %vm88, %v297
    %302 = vst.msk [vmem:[%s300 + $0xc] sm:$0xff] %vm88, %v298
    %303 = vst.msk [vmem:[%s300 + $0x14] sm:$0x3] %vm22, %v299
    %s304 = scalar_lea.vmem %s1, 24
    %v305 = vld [vmem:[%s304] sm:$0xf]
    %v306 = vld [vmem:[%s304 + $0x4] sm:$0xf]
    %v307 = vld [vmem:[%s304 + $0x8] sm:$0xf]
    %v308 = vld [vmem:[%s304 + $0xc] sm:$0xf]
    %v309 = vld [vmem:[%s304 + $0x10] sm:$0xf]
    %v310 = vld [vmem:[%s304 + $0x14] sm:$0xf]
    %s311 = scalar_lea.vmem %s2, 4
    %v312 = vld [vmem:[%s311] sm:$0x1]
    %v313 = vld [vmem:[%s311 + $0x1] sm:$0x1]
    %v314 = vld [vmem:[%s311 + $0x2] sm:$0x1]
    %v315 = vld [vmem:[#allocation3] sm:$0xff]
    %v316 = vld [vmem:[#allocation3 + $0x8] sm:$0xff]
    %v317 = vld [vmem:[#allocation3 + $0x10] sm:$0x3f]
    %v318 = vld [vmem:[#allocation3 + $0x2] sm:$0xff]
    %v319 = vld [vmem:[#allocation3 + $0xa] sm:$0xff]
    %v320 = vld [vmem:[#allocation3 + $0x12] sm:$0x3f]
    %v321 = vld [vmem:[#allocation3 + $0x4] sm:$0xff]
    %v322 = vld [vmem:[#allocation3 + $0xc] sm:$0xff]
    %v323 = vld [vmem:[#allocation3 + $0x14] sm:$0x3f]
    %327 = vrot.lane.b32.xlu0 %v318, 16
    %v328 = vpop.permute.xlu0 %327
    %329 = vrot.lane.b32.xlu0 %v319, 16
    %v330 = vpop.permute.xlu0 %329
    %331 = vrot.lane.b32.xlu0 %v320, 16
    %v332 = vpop.permute.xlu0 %331
    %339 = vrot.lane.b32.xlu0 %v321, 32
    %v340 = vpop.permute.xlu0 %339
    %341 = vrot.lane.b32.xlu0 %v322, 32
    %v342 = vpop.permute.xlu0 %341
    %343 = vrot.lane.b32.xlu0 %v323, 32
    %v344 = vpop.permute.xlu0 %343
    %v348 = vsel %vm88, %v315, %v328
    %v349 = vsel %vm88, %v316, %v330
    %v350 = vsel %vm88, %v317, %v332
    %v351 = vsel %vm92, %v348, %v340
    %v352 = vsel %vm92, %v349, %v342
    %v353 = vsel %vm92, %v350, %v344
    %v354 = vpack.c.bf16 %v352, %v351
    %v355 = vpack.c.bf16 %v353, %v353
    %v356 = vlaneseq
    %v357 = vshrl.u32 %v356, 7
    %v358 = vsub.s32 0, %v357
    %v359 = vrot.slane %v312, %v358
    %v366 = vunpack.c.l.b16 %v305
    %v367 = vunpack.c.l.b16 %v306
    %v368 = vunpack.c.l.b16 %v307
    %v369 = vunpack.c.l.b16 %v308
    %v370 = vunpack.c.l.b16 %v309
    %v371 = vunpack.c.l.b16 %v310
    %v372 = vpack.c.b16 %v367, %v366
    %v373 = vpack.c.b16 %v369, %v368
    %v374 = vpack.c.b16 %v371, %v370
    %v379 = vsel %vm120, %v354, 0
    %v382 = vsel %vm120, %v355, 0
    %384 = vmatprep.subr.bf16.mxu0 0
    %385 = vmatpush1.bf16.msra.mxu0 %v372
    %386 = vmatprep.subr.bf16.mxu0 0
    %387 = vmatpush1.bf16.msra.mxu0 %v373
    %388 = vmatprep.subr.bf16.mxu0 0
    %389 = vmatpush1.bf16.msra.mxu0 %v374
    %390 = vmatprep.subr.bf16.mxu0 0
    %391 = vmatpush1.bf16.msra.mxu0 0
    %392 = vmatprep.subr.bf16.mxu0 0
    %393 = vmatpush1.bf16.msra.mxu0 0
    %394 = vmatprep.subr.bf16.mxu0 0
    %395 = vmatpush1.bf16.msra.mxu0 0
    %396 = vmatprep.subr.bf16.mxu0 0
    %397 = vmatpush1.bf16.msra.mxu0 0
    %398 = vmatprep.subr.bf16.mxu0 0
    %399 = vmatpush1.bf16.msra.mxu0 0
    %400 = vmatprep.subr.bf16.mxu0 0
    %401 = vmatpush1.bf16.msra.mxu0 0
    %402 = vmatprep.subr.bf16.mxu0 0
    %403 = vmatpush1.bf16.msra.mxu0 0
    %404 = vmatprep.subr.bf16.mxu0 0
    %405 = vmatpush1.bf16.msra.mxu0 0
    %406 = vmatprep.subr.bf16.mxu0 0
    %407 = vmatpush1.bf16.msra.mxu0 0
    %408 = vmatprep.subr.bf16.mxu0 0
    %409 = vmatpush1.bf16.msra.mxu0 0
    %410 = vmatprep.subr.bf16.mxu0 0
    %411 = vmatpush1.bf16.msra.mxu0 0
    %412 = vmatprep.subr.bf16.mxu0 0
    %413 = vmatpush1.bf16.msra.mxu0 0
    %414 = vmatprep.subr.bf16.mxu0 0
    %415 = vmatpush1.bf16.msra.mxu0 0
    %416 = vmatprep.mubr.bf16.mxu0 0
    %417 = vmatmul.mubr.bf16.gmra.mrb[0].mxu0 %v379
    %v418 = vpop.f32.mrb[0].mxu0
    %v419 = vadd.f32 %v359, %v418
    %v420 = vpop.f32.mrb[0].mxu0
    %v421 = vpop.f32.mrb[0].mxu0
    %v422 = vadd.f32 %v359, %v421
    %v423 = vpop.f32.mrb[0].mxu0
    %424 = vmatprep.mubr.bf16.mxu0 0
    %425 = vmatmul.mubr.bf16.gmra.mrb[0].mxu0 %v382
    %v426 = vpop.f32.mrb[0].mxu0
    %v427 = vadd.f32 %v359, %v426
    %v428 = vpop.f32.mrb[0].mxu0
    %v429 = vpop.f32.mrb[0].mxu0
    %v430 = vpop.f32.mrb[0].mxu0
    %431 = vdwg.mxu0
    %v432 = vmax.f32 %v419, 0.0
    %v433 = vmax.f32 %v422, 0.0
    %v434 = vmax.f32 %v427, 0.0
    %v435 = vlaneseq
    %v436 = vshrl.u32 %v435, 7
    %v437 = vsub.s32 0, %v436
    %v438 = vrot.slane %v313, %v437
    %v439 = vmul.f32 %v432, %v438
    %v440 = vmul.f32 %v433, %v438
    %v441 = vmul.f32 %v434, %v438
    %v442 = vlaneseq
    %v443 = vshrl.u32 %v442, 7
    %v444 = vsub.s32 0, %v443
    %v445 = vrot.slane %v314, %v444
    %v446 = vadd.f32 %v439, %v445
    %v447 = vadd.f32 %v440, %v445
    %v448 = vadd.f32 %v441, %v445
    %vm449 = vcmask 122880
    %450 = vst.msk [vmem:[#allocation4] sm:$0x1] %vm449, %v446
    %v453 = vunpack.c.l.s4 1983009808
    %v454 = vunpack.c.0.s8 %v453
    %v455 = vlaneseq
    %v456 = vshrl.u32 %v455, 7
    %v457 = vsub.s32 %v454, %v456
    %v458 = vrot.slane %v446, %v457
    %v459 = vrot.slane %v458, 7
    %v460 = vrot.slane %v459, 2
    %461 = vrot.lane.b32.xlu0 %v460, 16
    %v462 = vpop.permute.xlu0 %461
    %vm464 = vcmask 254080
    %465 = vst.msk [vmem:[#allocation4] sm:$0x1] %vm464, %v462
    %v466 = vcombine.high %v458, %v458
    %467 = vrot.lane.b32.xlu0 %v466, 32
    %v468 = vpop.permute.xlu0 %467
    %vm470 = vcmask 385280
    %471 = vst.msk [vmem:[#allocation4] sm:$0x1] %vm470, %v468
    %v472 = vrot.slane %v466, 7
    %v473 = vrot.slane %v472, 2
    %474 = vrot.lane.b32.xlu0 %v473, 48
    %v475 = vpop.permute.xlu0 %474
    %vm477 = vcmask 516480
    %478 = vst.msk [vmem:[#allocation4] sm:$0x1] %vm477, %v475
    %v479 = vcombine.high %v446, %v446
    %v481 = vunpack.c.l.s4 1983009808
    %v482 = vunpack.c.0.s8 %v481
    %v483 = vlaneseq
    %v484 = vshrl.u32 %v483, 7
    %v485 = vsub.s32 %v482, %v484
    %v486 = vrot.slane %v479, %v485
    %487 = vrot.lane.b32.xlu0 %v486, 64
    %v488 = vpop.permute.xlu0 %487
    %vm490 = vcmask 647680
    %491 = vst.msk [vmem:[#allocation4] sm:$0x1] %vm490, %v488
    %v492 = vrot.slane %v486, 7
    %v493 = vrot.slane %v492, 2
    %494 = vrot.lane.b32.xlu0 %v493, 80
    %v495 = vpop.permute.xlu0 %494
    %vm497 = vcmask 778880
    %498 = vst.msk [vmem:[#allocation4] sm:$0x1] %vm497, %v495
    %v499 = vcombine.high %v486, %v486
    %500 = vrot.lane.b32.xlu0 %v499, 96
    %v501 = vpop.permute.xlu0 %500
    %vm503 = vcmask 910080
    %504 = vst.msk [vmem:[#allocation4] sm:$0x1] %vm503, %v501
    %v505 = vrot.slane %v499, 7
    %v506 = vrot.slane %v505, 2
    %507 = vrot.lane.b32.xlu0 %v506, 112
    %v508 = vpop.permute.xlu0 %507
    %vm510 = vcmask 1041280
    %511 = vst.msk [vmem:[#allocation4] sm:$0x1] %vm510, %v508
    %512 = vst.msk [vmem:[#allocation4 + $0x2] sm:$0x1] %vm449, %v447
    %v515 = vunpack.c.l.s4 1983009808
    %v516 = vunpack.c.0.s8 %v515
    %v517 = vlaneseq
    %v518 = vshrl.u32 %v517, 7
    %v519 = vsub.s32 %v516, %v518
    %v520 = vrot.slane %v447, %v519
    %v521 = vrot.slane %v520, 7
    %v522 = vrot.slane %v521, 2
    %523 = vrot.lane.b32.xlu0 %v522, 16
    %v524 = vpop.permute.xlu0 %523
    %526 = vst.msk [vmem:[#allocation4 + $0x2] sm:$0x1] %vm464, %v524
    %v527 = vcombine.high %v520, %v520
    %528 = vrot.lane.b32.xlu0 %v527, 32
    %v529 = vpop.permute.xlu0 %528
    %531 = vst.msk [vmem:[#allocation4 + $0x2] sm:$0x1] %vm470, %v529
    %v532 = vrot.slane %v527, 7
    %v533 = vrot.slane %v532, 2
    %534 = vrot.lane.b32.xlu0 %v533, 48
    %v535 = vpop.permute.xlu0 %534
    %537 = vst.msk [vmem:[#allocation4 + $0x2] sm:$0x1] %vm477, %v535
    %v538 = vcombine.high %v447, %v447
    %v540 = vunpack.c.l.s4 1983009808
    %v541 = vunpack.c.0.s8 %v540
    %v542 = vlaneseq
    %v543 = vshrl.u32 %v542, 7
    %v544 = vsub.s32 %v541, %v543
    %v545 = vrot.slane %v538, %v544
    %546 = vrot.lane.b32.xlu0 %v545, 64
    %v547 = vpop.permute.xlu0 %546
    %549 = vst.msk [vmem:[#allocation4 + $0x2] sm:$0x1] %vm490, %v547
    %v550 = vrot.slane %v545, 7
    %v551 = vrot.slane %v550, 2
    %552 = vrot.lane.b32.xlu0 %v551, 80
    %v553 = vpop.permute.xlu0 %552
    %555 = vst.msk [vmem:[#allocation4 + $0x2] sm:$0x1] %vm497, %v553
    %v556 = vcombine.high %v545, %v545
    %557 = vrot.lane.b32.xlu0 %v556, 96
    %v558 = vpop.permute.xlu0 %557
    %560 = vst.msk [vmem:[#allocation4 + $0x2] sm:$0x1] %vm503, %v558
    %v561 = vrot.slane %v556, 7
    %v562 = vrot.slane %v561, 2
    %563 = vrot.lane.b32.xlu0 %v562, 112
    %v564 = vpop.permute.xlu0 %563
    %566 = vst.msk [vmem:[#allocation4 + $0x2] sm:$0x1] %vm510, %v564
    %567 = vst.msk [vmem:[#allocation4 + $0x4] sm:$0x1] %vm449, %v448
    %v570 = vunpack.c.l.s4 1983009808
    %v571 = vunpack.c.0.s8 %v570
    %v572 = vlaneseq
    %v573 = vshrl.u32 %v572, 7
    %v574 = vsub.s32 %v571, %v573
    %v575 = vrot.slane %v448, %v574
    %v576 = vrot.slane %v575, 7
    %v577 = vrot.slane %v576, 2
    %578 = vrot.lane.b32.xlu0 %v577, 16
    %v579 = vpop.permute.xlu0 %578
    %581 = vst.msk [vmem:[#allocation4 + $0x4] sm:$0x1] %vm464, %v579
    %v582 = vcombine.high %v575, %v575
    %583 = vrot.lane.b32.xlu0 %v582, 32
    %v584 = vpop.permute.xlu0 %583
    %586 = vst.msk [vmem:[#allocation4 + $0x4] sm:$0x1] %vm470, %v584
    %v587 = vrot.slane %v582, 7
    %v588 = vrot.slane %v587, 2
    %589 = vrot.lane.b32.xlu0 %v588, 48
    %v590 = vpop.permute.xlu0 %589
    %592 = vst.msk [vmem:[#allocation4 + $0x4] sm:$0x1] %vm477, %v590
    %v593 = vcombine.high %v448, %v448
    %v595 = vunpack.c.l.s4 1983009808
    %v596 = vunpack.c.0.s8 %v595
    %v597 = vlaneseq
    %v598 = vshrl.u32 %v597, 7
    %v599 = vsub.s32 %v596, %v598
    %v600 = vrot.slane %v593, %v599
    %601 = vrot.lane.b32.xlu0 %v600, 64
    %v602 = vpop.permute.xlu0 %601
    %604 = vst.msk [vmem:[#allocation4 + $0x4] sm:$0x1] %vm490, %v602
    %v605 = vrot.slane %v600, 7
    %v606 = vrot.slane %v605, 2
    %607 = vrot.lane.b32.xlu0 %v606, 80
    %v608 = vpop.permute.xlu0 %607
    %610 = vst.msk [vmem:[#allocation4 + $0x4] sm:$0x1] %vm497, %v608
    %v611 = vld [vmem:[%s300] sm:$0xff]
    %v612 = vld [vmem:[%s300 + $0x8] sm:$0xff]
    %v613 = vld [vmem:[%s300 + $0x10] sm:$0x3f]
    %v614 = vld [vmem:[%s300 + $0x2] sm:$0xff]
    %v615 = vld [vmem:[%s300 + $0xa] sm:$0xff]
    %v616 = vld [vmem:[%s300 + $0x12] sm:$0x3f]
    %v617 = vld [vmem:[%s300 + $0x4] sm:$0xff]
    %v618 = vld [vmem:[%s300 + $0xc] sm:$0xff]
    %v619 = vld [vmem:[%s300 + $0x14] sm:$0x3f]
    %623 = vrot.lane.b32.xlu0 %v614, 16
    %v624 = vpop.permute.xlu0 %623
    %625 = vrot.lane.b32.xlu0 %v615, 16
    %v626 = vpop.permute.xlu0 %625
    %627 = vrot.lane.b32.xlu0 %v616, 16
    %v628 = vpop.permute.xlu0 %627
    %635 = vrot.lane.b32.xlu0 %v617, 32
    %v636 = vpop.permute.xlu0 %635
    %637 = vrot.lane.b32.xlu0 %v618, 32
    %v638 = vpop.permute.xlu0 %637
    %639 = vrot.lane.b32.xlu0 %v619, 32
    %v640 = vpop.permute.xlu0 %639
    %v644 = vsel %vm88, %v611, %v624
    %v645 = vsel %vm88, %v612, %v626
    %v646 = vsel %vm88, %v613, %v628
    %v647 = vsel %vm92, %v644, %v636
    %v648 = vsel %vm92, %v645, %v638
    %v649 = vsel %vm92, %v646, %v640
    %v650 = vpack.c.bf16 %v648, %v647
    %v651 = vpack.c.bf16 %v649, %v649
    %v653 = vsel %vm120, %v650, 0
    %v656 = vsel %vm120, %v651, 0
    %658 = vmatprep.subr.bf16.mxu0 0
    %659 = vmatpush1.bf16.msra.mxu0 %v372
    %660 = vmatprep.subr.bf16.mxu0 0
    %661 = vmatpush1.bf16.msra.mxu0 %v373
    %662 = vmatprep.subr.bf16.mxu0 0
    %663 = vmatpush1.bf16.msra.mxu0 %v374
    %664 = vmatprep.subr.bf16.mxu0 0
    %665 = vmatpush1.bf16.msra.mxu0 0
    %666 = vmatprep.subr.bf16.mxu0 0
    %667 = vmatpush1.bf16.msra.mxu0 0
    %668 = vmatprep.subr.bf16.mxu0 0
    %669 = vmatpush1.bf16.msra.mxu0 0
    %670 = vmatprep.subr.bf16.mxu0 0
    %671 = vmatpush1.bf16.msra.mxu0 0
    %672 = vmatprep.subr.bf16.mxu0 0
    %673 = vmatpush1.bf16.msra.mxu0 0
    %674 = vmatprep.subr.bf16.mxu0 0
    %675 = vmatpush1.bf16.msra.mxu0 0
    %676 = vmatprep.subr.bf16.mxu0 0
    %677 = vmatpush1.bf16.msra.mxu0 0
    %678 = vmatprep.subr.bf16.mxu0 0
    %679 = vmatpush1.bf16.msra.mxu0 0
    %680 = vmatprep.subr.bf16.mxu0 0
    %681 = vmatpush1.bf16.msra.mxu0 0
    %682 = vmatprep.subr.bf16.mxu0 0
    %683 = vmatpush1.bf16.msra.mxu0 0
    %684 = vmatprep.subr.bf16.mxu0 0
    %685 = vmatpush1.bf16.msra.mxu0 0
    %686 = vmatprep.subr.bf16.mxu0 0
    %687 = vmatpush1.bf16.msra.mxu0 0
    %688 = vmatprep.subr.bf16.mxu0 0
    %689 = vmatpush1.bf16.msra.mxu0 0
    %690 = vmatprep.mubr.bf16.mxu0 0
    %691 = vmatmul.mubr.bf16.gmra.mrb[0].mxu0 %v653
    %v692 = vpop.f32.mrb[0].mxu0
    %v693 = vadd.f32 %v359, %v692
    %v694 = vpop.f32.mrb[0].mxu0
    %v695 = vpop.f32.mrb[0].mxu0
    %v696 = vadd.f32 %v359, %v695
    %v697 = vpop.f32.mrb[0].mxu0
    %698 = vmatprep.mubr.bf16.mxu0 0
    %699 = vmatmul.mubr.bf16.gmra.mrb[0].mxu0 %v656
    %v700 = vpop.f32.mrb[0].mxu0
    %v701 = vadd.f32 %v359, %v700
    %v702 = vpop.f32.mrb[0].mxu0
    %v703 = vpop.f32.mrb[0].mxu0
    %v704 = vpop.f32.mrb[0].mxu0
    %705 = vdwg.mxu0
    %v706 = vmax.f32 %v693, 0.0
    %v707 = vmax.f32 %v696, 0.0
    %v708 = vmax.f32 %v701, 0.0
    %v709 = vmul.f32 %v706, %v438
    %v710 = vmul.f32 %v707, %v438
    %v711 = vmul.f32 %v708, %v438
    %v712 = vadd.f32 %v709, %v445
    %v713 = vadd.f32 %v710, %v445
    %v714 = vadd.f32 %v711, %v445
    %715 = vst.msk [vmem:[#allocation4 + $0x1] sm:$0x1] %vm449, %v712
    %v718 = vunpack.c.l.s4 1983009808
    %v719 = vunpack.c.0.s8 %v718
    %v720 = vlaneseq
    %v721 = vshrl.u32 %v720, 7
    %v722 = vsub.s32 %v719, %v721
    %v723 = vrot.slane %v712, %v722
    %v724 = vrot.slane %v723, 7
    %v725 = vrot.slane %v724, 2
    %726 = vrot.lane.b32.xlu0 %v725, 16
    %v727 = vpop.permute.xlu0 %726
    %729 = vst.msk [vmem:[#allocation4 + $0x1] sm:$0x1] %vm464, %v727
    %v730 = vcombine.high %v723, %v723
    %731 = vrot.lane.b32.xlu0 %v730, 32
    %v732 = vpop.permute.xlu0 %731
    %734 = vst.msk [vmem:[#allocation4 + $0x1] sm:$0x1] %vm470, %v732
    %v735 = vrot.slane %v730, 7
    %v736 = vrot.slane %v735, 2
    %737 = vrot.lane.b32.xlu0 %v736, 48
    %v738 = vpop.permute.xlu0 %737
    %740 = vst.msk [vmem:[#allocation4 + $0x1] sm:$0x1] %vm477, %v738
    %v741 = vcombine.high %v712, %v712
    %v743 = vunpack.c.l.s4 1983009808
    %v744 = vunpack.c.0.s8 %v743
    %v745 = vlaneseq
    %v746 = vshrl.u32 %v745, 7
    %v747 = vsub.s32 %v744, %v746
    %v748 = vrot.slane %v741, %v747
    %749 = vrot.lane.b32.xlu0 %v748, 64
    %v750 = vpop.permute.xlu0 %749
    %752 = vst.msk [vmem:[#allocation4 + $0x1] sm:$0x1] %vm490, %v750
    %v753 = vrot.slane %v748, 7
    %v754 = vrot.slane %v753, 2
    %755 = vrot.lane.b32.xlu0 %v754, 80
    %v756 = vpop.permute.xlu0 %755
    %758 = vst.msk [vmem:[#allocation4 + $0x1] sm:$0x1] %vm497, %v756
    %v759 = vcombine.high %v748, %v748
    %760 = vrot.lane.b32.xlu0 %v759, 96
    %v761 = vpop.permute.xlu0 %760
    %763 = vst.msk [vmem:[#allocation4 + $0x1] sm:$0x1] %vm503, %v761
    %v764 = vrot.slane %v759, 7
    %v765 = vrot.slane %v764, 2
    %766 = vrot.lane.b32.xlu0 %v765, 112
    %v767 = vpop.permute.xlu0 %766
    %769 = vst.msk [vmem:[#allocation4 + $0x1] sm:$0x1] %vm510, %v767
    %770 = vst.msk [vmem:[#allocation4 + $0x3] sm:$0x1] %vm449, %v713
    %v773 = vunpack.c.l.s4 1983009808
    %v774 = vunpack.c.0.s8 %v773
    %v775 = vlaneseq
    %v776 = vshrl.u32 %v775, 7
    %v777 = vsub.s32 %v774, %v776
    %v778 = vrot.slane %v713, %v777
    %v779 = vrot.slane %v778, 7
    %v780 = vrot.slane %v779, 2
    %781 = vrot.lane.b32.xlu0 %v780, 16
    %v782 = vpop.permute.xlu0 %781
    %784 = vst.msk [vmem:[#allocation4 + $0x3] sm:$0x1] %vm464, %v782
    %v785 = vcombine.high %v778, %v778
    %786 = vrot.lane.b32.xlu0 %v785, 32
    %v787 = vpop.permute.xlu0 %786
    %789 = vst.msk [vmem:[#allocation4 + $0x3] sm:$0x1] %vm470, %v787
    %v790 = vrot.slane %v785, 7
    %v791 = vrot.slane %v790, 2
    %792 = vrot.lane.b32.xlu0 %v791, 48
    %v793 = vpop.permute.xlu0 %792
    %795 = vst.msk [vmem:[#allocation4 + $0x3] sm:$0x1] %vm477, %v793
    %v796 = vcombine.high %v713, %v713
    %v798 = vunpack.c.l.s4 1983009808
    %v799 = vunpack.c.0.s8 %v798
    %v800 = vlaneseq
    %v801 = vshrl.u32 %v800, 7
    %v802 = vsub.s32 %v799, %v801
    %v803 = vrot.slane %v796, %v802
    %804 = vrot.lane.b32.xlu0 %v803, 64
    %v805 = vpop.permute.xlu0 %804
    %807 = vst.msk [vmem:[#allocation4 + $0x3] sm:$0x1] %vm490, %v805
    %v808 = vrot.slane %v803, 7
    %v809 = vrot.slane %v808, 2
    %810 = vrot.lane.b32.xlu0 %v809, 80
    %v811 = vpop.permute.xlu0 %810
    %813 = vst.msk [vmem:[#allocation4 + $0x3] sm:$0x1] %vm497, %v811
    %v814 = vcombine.high %v803, %v803
    %815 = vrot.lane.b32.xlu0 %v814, 96
    %v816 = vpop.permute.xlu0 %815
    %818 = vst.msk [vmem:[#allocation4 + $0x3] sm:$0x1] %vm503, %v816
    %v819 = vrot.slane %v814, 7
    %v820 = vrot.slane %v819, 2
    %821 = vrot.lane.b32.xlu0 %v820, 112
    %v822 = vpop.permute.xlu0 %821
    %824 = vst.msk [vmem:[#allocation4 + $0x3] sm:$0x1] %vm510, %v822
    %825 = vst.msk [vmem:[#allocation4 + $0x5] sm:$0x1] %vm449, %v714
    %v828 = vunpack.c.l.s4 1983009808
    %v829 = vunpack.c.0.s8 %v828
    %v830 = vlaneseq
    %v831 = vshrl.u32 %v830, 7
    %v832 = vsub.s32 %v829, %v831
    %v833 = vrot.slane %v714, %v832
    %v834 = vrot.slane %v833, 7
    %v835 = vrot.slane %v834, 2
    %836 = vrot.lane.b32.xlu0 %v835, 16
    %v837 = vpop.permute.xlu0 %836
    %839 = vst.msk [vmem:[#allocation4 + $0x5] sm:$0x1] %vm464, %v837
    %v840 = vcombine.high %v833, %v833
    %841 = vrot.lane.b32.xlu0 %v840, 32
    %v842 = vpop.permute.xlu0 %841
    %844 = vst.msk [vmem:[#allocation4 + $0x5] sm:$0x1] %vm470, %v842
    %v845 = vrot.slane %v840, 7
    %v846 = vrot.slane %v845, 2
    %847 = vrot.lane.b32.xlu0 %v846, 48
    %v848 = vpop.permute.xlu0 %847
    %850 = vst.msk [vmem:[#allocation4 + $0x5] sm:$0x1] %vm477, %v848
    %v851 = vcombine.high %v714, %v714
    %v853 = vunpack.c.l.s4 1983009808
    %v854 = vunpack.c.0.s8 %v853
    %v855 = vlaneseq
    %v856 = vshrl.u32 %v855, 7
    %v857 = vsub.s32 %v854, %v856
    %v858 = vrot.slane %v851, %v857
    %859 = vrot.lane.b32.xlu0 %v858, 64
    %v860 = vpop.permute.xlu0 %859
    %862 = vst.msk [vmem:[#allocation4 + $0x5] sm:$0x1] %vm490, %v860
    %v863 = vrot.slane %v858, 7
    %v864 = vrot.slane %v863, 2
    %865 = vrot.lane.b32.xlu0 %v864, 80
    %v866 = vpop.permute.xlu0 %865
    %868 = vst.msk [vmem:[#allocation4 + $0x5] sm:$0x1] %vm497, %v866
    %v869 = vld [vmem:[#allocation4] sm:$0x3f]
    %v871 = vcombine.high %v869, %v869
    %v873 = vunpack.c.l.s4 1983009808
    %v874 = vunpack.c.0.s8 %v873
    %v875 = vlaneseq
    %v876 = vshrl.u32 %v875, 7
    %v877 = vsub.s32 %v874, %v876
    %v878 = vrot.slane %v869, %v877
    %v880 = vunpack.c.l.s4 1983009808
    %v881 = vunpack.c.0.s8 %v880
    %v882 = vlaneseq
    %v883 = vshrl.u32 %v882, 7
    %v884 = vsub.s32 %v881, %v883
    %v885 = vrot.slane %v871, %v884
    %v886 = vcombine.high %v878, %v878
    %v890 = vpack.c.bf16 %v878, %v878
    %v891 = vpack.c.bf16 %v886, %v886
    %v892 = vpack.c.bf16 %v885, %v885
    %v893 = vld [vmem:[%s3] sm:$0xf]
    %v894 = vld [vmem:[%s3 + $0x4] sm:$0xf]
    %v895 = vld [vmem:[%s3 + $0x8] sm:$0xf]
    %v896 = vld [vmem:[%s3 + $0xc] sm:$0xf]
    %v897 = vld [vmem:[%s3 + $0x10] sm:$0xf]
    %v898 = vld [vmem:[%s3 + $0x14] sm:$0xf]
    %v899 = vld [vmem:[%s3 + $0x18] sm:$0xf]
    %v900 = vld [vmem:[%s3 + $0x1c] sm:$0xf]
    %v901 = vld [vmem:[%s3 + $0x20] sm:$0xf]
    %v902 = vld [vmem:[%s3 + $0x24] sm:$0xf]
    %v903 = vld [vmem:[%s3 + $0x28] sm:$0xf]
    %v904 = vld [vmem:[%s3 + $0x2c] sm:$0xf]
    %v905 = vld [vmem:[%s3 + $0x30] sm:$0xf]
    %v906 = vld [vmem:[%s3 + $0x34] sm:$0xf]
    %v907 = vld [vmem:[%s3 + $0x38] sm:$0xf]
    %v908 = vld [vmem:[%s3 + $0x3c] sm:$0xf]
    %v909 = vld [vmem:[%s3 + $0x40] sm:$0xf]
    %v910 = vld [vmem:[%s3 + $0x44] sm:$0xf]
    %v911 = vld [vmem:[%s3 + $0x48] sm:$0xf]
    %v912 = vld [vmem:[%s3 + $0x4c] sm:$0xf]
    %v913 = vld [vmem:[%s3 + $0x50] sm:$0xf]
    %v914 = vld [vmem:[%s3 + $0x54] sm:$0xf]
    %v915 = vld [vmem:[%s3 + $0x58] sm:$0xf]
    %v916 = vld [vmem:[%s3 + $0x5c] sm:$0xf]
    %v917 = vld [vmem:[%s3 + $0x60] sm:$0xf]
    %v918 = vld [vmem:[%s3 + $0x64] sm:$0xf]
    %v919 = vld [vmem:[%s3 + $0x68] sm:$0xf]
    %v920 = vld [vmem:[%s3 + $0x6c] sm:$0xf]
    %v921 = vld [vmem:[%s3 + $0x70] sm:$0xf]
    %v922 = vld [vmem:[%s3 + $0x74] sm:$0xf]
    %v923 = vld [vmem:[%s3 + $0x78] sm:$0xf]
    %v924 = vld [vmem:[%s3 + $0x7c] sm:$0xf]
    %v925 = vld [vmem:[%s3 + $0x80] sm:$0xf]
    %v926 = vld [vmem:[%s3 + $0x84] sm:$0xf]
    %v927 = vld [vmem:[%s3 + $0x88] sm:$0xf]
    %v928 = vld [vmem:[%s3 + $0x8c] sm:$0xf]
    %v929 = vld [vmem:[%s3 + $0x90] sm:$0xf]
    %v930 = vld [vmem:[%s3 + $0x94] sm:$0xf]
    %v931 = vld [vmem:[%s3 + $0x98] sm:$0xf]
    %v932 = vld [vmem:[%s3 + $0x9c] sm:$0xf]
    %v933 = vld [vmem:[%s3 + $0xa0] sm:$0xf]
    %v934 = vld [vmem:[%s3 + $0xa4] sm:$0xf]
    %v935 = vld [vmem:[%s3 + $0xa8] sm:$0xf]
    %v936 = vld [vmem:[%s3 + $0xac] sm:$0xf]
    %v937 = vld [vmem:[%s4] sm:$0x1]
    %v939 = vlaneseq
    %v940 = vshrl.u32 %v939, 7
    %v941 = vsub.s32 0, %v940
    %v942 = vrot.slane %v937, %v941
    %v988 = vunpack.c.l.b16 %v893
    %v989 = vunpack.c.l.b16 %v894
    %v990 = vunpack.c.l.b16 %v895
    %v991 = vunpack.c.l.b16 %v896
    %v992 = vunpack.c.l.b16 %v897
    %v993 = vunpack.c.l.b16 %v898
    %v994 = vunpack.c.l.b16 %v899
    %v995 = vunpack.c.l.b16 %v900
    %v996 = vunpack.c.l.b16 %v901
    %v997 = vunpack.c.l.b16 %v902
    %v998 = vunpack.c.l.b16 %v903
    %v999 = vunpack.c.l.b16 %v904
    %v1000 = vunpack.c.l.b16 %v905
    %v1001 = vunpack.c.l.b16 %v906
    %v1002 = vunpack.c.l.b16 %v907
    %v1003 = vunpack.c.l.b16 %v908
    %v1004 = vunpack.c.l.b16 %v909
    %v1005 = vunpack.c.l.b16 %v910
    %v1006 = vunpack.c.l.b16 %v911
    %v1007 = vunpack.c.l.b16 %v912
    %v1008 = vunpack.c.l.b16 %v913
    %v1009 = vunpack.c.l.b16 %v914
    %v1010 = vunpack.c.l.b16 %v915
    %v1011 = vunpack.c.l.b16 %v916
    %v1012 = vunpack.c.l.b16 %v917
    %v1013 = vunpack.c.l.b16 %v918
    %v1014 = vunpack.c.l.b16 %v919
    %v1015 = vunpack.c.l.b16 %v920
    %v1016 = vunpack.c.l.b16 %v921
    %v1017 = vunpack.c.l.b16 %v922
    %v1018 = vunpack.c.l.b16 %v923
    %v1019 = vunpack.c.l.b16 %v924
    %v1020 = vunpack.c.l.b16 %v925
    %v1021 = vunpack.c.l.b16 %v926
    %v1022 = vunpack.c.l.b16 %v927
    %v1023 = vunpack.c.l.b16 %v928
    %v1024 = vunpack.c.l.b16 %v929
    %v1025 = vunpack.c.l.b16 %v930
    %v1026 = vunpack.c.l.b16 %v931
    %v1027 = vunpack.c.l.b16 %v932
    %v1028 = vunpack.c.l.b16 %v933
    %v1029 = vunpack.c.l.b16 %v934
    %v1030 = vunpack.c.l.b16 %v935
    %v1031 = vunpack.c.l.b16 %v936
    %v1032 = vpack.c.b16 %v989, %v988
    %v1033 = vpack.c.b16 %v991, %v990
    %v1034 = vpack.c.b16 %v993, %v992
    %v1035 = vpack.c.b16 %v995, %v994
    %v1036 = vpack.c.b16 %v997, %v996
    %v1037 = vpack.c.b16 %v999, %v998
    %v1038 = vpack.c.b16 %v1001, %v1000
    %v1039 = vpack.c.b16 %v1003, %v1002
    %v1040 = vpack.c.b16 %v1005, %v1004
    %v1041 = vpack.c.b16 %v1007, %v1006
    %v1042 = vpack.c.b16 %v1009, %v1008
    %v1043 = vpack.c.b16 %v1011, %v1010
    %v1044 = vpack.c.b16 %v1013, %v1012
    %v1045 = vpack.c.b16 %v1015, %v1014
    %v1046 = vpack.c.b16 %v1017, %v1016
    %v1047 = vpack.c.b16 %v1019, %v1018
    %v1048 = vpack.c.b16 %v1021, %v1020
    %v1049 = vpack.c.b16 %v1023, %v1022
    %v1050 = vpack.c.b16 %v1025, %v1024
    %v1051 = vpack.c.b16 %v1027, %v1026
    %v1052 = vpack.c.b16 %v1029, %v1028
    %v1053 = vpack.c.b16 %v1031, %v1030
    %vm1076 = vcmask 785408
    %v1078 = vsel %vm1076, %v892, 0
    %1080 = vmatprep.subr.bf16.mxu0 0
    %1081 = vmatpush1.bf16.msra.mxu0 %v1032
    %1082 = vmatprep.subr.bf16.mxu0 0
    %1083 = vmatpush1.bf16.msra.mxu0 %v1033
    %1084 = vmatprep.subr.bf16.mxu0 0
    %1085 = vmatpush1.bf16.msra.mxu0 %v1034
    %1086 = vmatprep.subr.bf16.mxu0 0
    %1087 = vmatpush1.bf16.msra.mxu0 %v1035
    %1088 = vmatprep.subr.bf16.mxu0 0
    %1089 = vmatpush1.bf16.msra.mxu0 %v1036
    %1090 = vmatprep.subr.bf16.mxu0 0
    %1091 = vmatpush1.bf16.msra.mxu0 %v1037
    %1092 = vmatprep.subr.bf16.mxu0 0
    %1093 = vmatpush1.bf16.msra.mxu0 %v1038
    %1094 = vmatprep.subr.bf16.mxu0 0
    %1095 = vmatpush1.bf16.msra.mxu0 %v1039
    %1096 = vmatprep.subr.bf16.mxu0 0
    %1097 = vmatpush1.bf16.msra.mxu0 %v1040
    %1098 = vmatprep.subr.bf16.mxu0 0
    %1099 = vmatpush1.bf16.msra.mxu0 %v1041
    %1100 = vmatprep.subr.bf16.mxu0 0
    %1101 = vmatpush1.bf16.msra.mxu0 %v1042
    %1102 = vmatprep.subr.bf16.mxu0 0
    %1103 = vmatpush1.bf16.msra.mxu0 %v1043
    %1104 = vmatprep.subr.bf16.mxu0 0
    %1105 = vmatpush1.bf16.msra.mxu0 %v1044
    %1106 = vmatprep.subr.bf16.mxu0 0
    %1107 = vmatpush1.bf16.msra.mxu0 %v1045
    %1108 = vmatprep.subr.bf16.mxu0 0
    %1109 = vmatpush1.bf16.msra.mxu0 %v1046
    %1110 = vmatprep.subr.bf16.mxu0 0
    %1111 = vmatpush1.bf16.msra.mxu0 %v1047
    %1112 = vmatprep.mubr.bf16.mxu0 %v891
    %1113 = vmatmul.mubr.bf16.gmra.mrb[0].mxu0 %v890
    %v1114 = vpop.f32.mrb[0].mxu0
    %v1115 = vadd.f32 %v942, %v1114
    %v1116 = vpop.f32.mrb[0].mxu0
    %v1117 = vpop.f32.mrb[0].mxu0
    %v1118 = vpop.f32.mrb[0].mxu0
    %1119 = vdwg.mxu0
    %1120 = vmatprep.subr.bf16.mxu0 0
    %1121 = vmatpush1.bf16.msra.mxu0 %v1048
    %1122 = vmatprep.subr.bf16.mxu0 0
    %1123 = vmatpush1.bf16.msra.mxu0 %v1049
    %1124 = vmatprep.subr.bf16.mxu0 0
    %1125 = vmatpush1.bf16.msra.mxu0 %v1050
    %1126 = vmatprep.subr.bf16.mxu0 0
    %1127 = vmatpush1.bf16.msra.mxu0 %v1051
    %1128 = vmatprep.subr.bf16.mxu0 0
    %1129 = vmatpush1.bf16.msra.mxu0 %v1052
    %1130 = vmatprep.subr.bf16.mxu0 0
    %1131 = vmatpush1.bf16.msra.mxu0 %v1053
    %1132 = vmatprep.subr.bf16.mxu0 0
    %1133 = vmatpush1.bf16.msra.mxu0 0
    %1134 = vmatprep.subr.bf16.mxu0 0
    %1135 = vmatpush1.bf16.msra.mxu0 0
    %1136 = vmatprep.subr.bf16.mxu0 0
    %1137 = vmatpush1.bf16.msra.mxu0 0
    %1138 = vmatprep.subr.bf16.mxu0 0
    %1139 = vmatpush1.bf16.msra.mxu0 0
    %1140 = vmatprep.subr.bf16.mxu0 0
    %1141 = vmatpush1.bf16.msra.mxu0 0
    %1142 = vmatprep.subr.bf16.mxu0 0
    %1143 = vmatpush1.bf16.msra.mxu0 0
    %1144 = vmatprep.subr.bf16.mxu0 0
    %1145 = vmatpush1.bf16.msra.mxu0 0
    %1146 = vmatprep.subr.bf16.mxu0 0
    %1147 = vmatpush1.bf16.msra.mxu0 0
    %1148 = vmatprep.subr.bf16.mxu0 0
    %1149 = vmatpush1.bf16.msra.mxu0 0
    %1150 = vmatprep.subr.bf16.mxu0 0
    %1151 = vmatpush1.bf16.msra.mxu0 0
    %1152 = vmatprep.mubr.bf16.mxu0 0
    %1153 = vmatmul.mubr.bf16.gmra.mrb[0].mxu0 %v1078
    %v1154 = vpop.f32.mrb[0].mxu0
    %v1155 = vadd.f32 %v1115, %v1154
    %v1156 = vpop.f32.mrb[0].mxu0
    %v1157 = vpop.f32.mrb[0].mxu0
    %v1158 = vpop.f32.mrb[0].mxu0
    %1159 = vdwg.mxu0
    %1160 = vst.msk [vmem:[#allocation5] sm:$0x3] %vm22, %v1155
    // Predicated region
    $region22: #{tpu_custom_call.1} parent=1 // pred_check
      _
    $region23: #{tpu_custom_call.1} parent=1 // pred_check_branch
      %1162 = sbr.rel (0) target = $region25
    $region24: #{tpu_custom_call.1} parent=1 // pred_region
      %s1164 = ssub.s32 32, 32
      %1165 = vsyncadd [#allocation6], %s1164
      %s1167 = sshll.u32 [#allocation5], 4
      %s1168 = int_to_ptr.vmem [resolvable:$true] %s1167
      %1170 = dma.vmem_to_hbm [thread:$0]  %s1168, 32, %s5, [#allocation6]
    $region25: #{tpu_custom_call.1} parent=1 // pred_fallthru
      _
    // Predicated region
    $region26: #{tpu_custom_call.1} parent=1 // pred_check
      _
    $region27: #{tpu_custom_call.1} parent=1 // pred_check_branch
      %1172 = sbr.rel (0) target = $region29
    $region28: #{tpu_custom_call.1} parent=1 // pred_region
      %1173 = dma.done [#allocation6], 32
    $region29: #{tpu_custom_call.1} parent=1 // pred_fallthru
      _
    %1174 = vsyncpa [#allocation6], 1

</llo_original>
